<compile_context>
chip_gen: v5e
topology: v5e:2x2
jax: 0.10.0
libtpu: 0.0.40
codegen_flags: <defaults>
</compile_context>

<pallas_src>
import jax
import jax.numpy as jnp
from jax import lax
from jax.experimental import pallas as pl
from jax.experimental.pallas import tpu as pltpu


def _round_up(x, m):
    return ((x + m - 1) // m) * m


def _make_score_kernel(C, Wp, Lout):
    """Kernel: effective 3x3 conv via 9 lane-shifted taps, VPU only."""
    taps = [(di, dj) for di in range(3) for dj in range(3)]

    def kernel(wb_ref, x_ref, o_ref):
        # wb_ref: SMEM (9*C*C + C,) f32  -- folded weights then folded bias
        # x_ref:  VMEM (C, Lin)  padded image, flattened (Hp*Wp) + zero tail
        # o_ref:  VMEM (C, Lout) score in padded-flat coordinates
        # init each output-channel accumulator with the folded bias
        accs = [jnp.full((1, Lout), wb_ref[9 * C * C + co], dtype=jnp.float32)
                for co in range(C)]
        for t, (di, dj) in enumerate(taps):
            off = di * Wp + dj                       # static lane offset
            for ci in range(C):
                xci = x_ref[pl.ds(ci, 1), pl.ds(off, Lout)]      # (1, Lout)
                for co in range(C):
                    w = wb_ref[(t * C + ci) * C + co]            # SMEM scalar
                    accs[co] = accs[co] + w * xci                # VPU FMA
        o_ref[...] = jnp.concatenate(accs, axis=0)               # (C, Lout)

    return kernel


def score_prior_forward(x_nchw, sigma, w_oihw, bias):
    """ScorePrior.forward: (x - (conv3x3(x)+b)) / sigma**2, conv in Pallas."""
    N, C, H, W = x_nchw.shape
    Hp, Wp = H + 2, W + 2
    inv_s2 = 1.0 / (sigma * sigma)

    # ---- fold Tweedie residual + 1/sigma^2 into one effective conv ----
    # score[co] = inv_s2*x[co] - inv_s2*(conv(x,w)[co] + b[co])
    #           = conv(x, w_eff)[co] + b_eff[co]
    w_eff = (-inv_s2) * w_oihw.astype(jnp.float32)        # (Co, Ci, 3, 3)
    eye = jnp.eye(C, dtype=jnp.float32)
    w_eff = w_eff.at[:, :, 1, 1].add(inv_s2 * eye)        # identity at center tap
    b_eff = (-inv_s2) * bias.astype(jnp.float32)          # (C,)

    # flat layout expected by the kernel: index = ((di*3+dj)*C + ci)*C + co
    w_flat = jnp.transpose(w_eff, (2, 3, 1, 0)).reshape(-1)        # (9*C*C,)
    wb = jnp.concatenate([w_flat, b_eff.reshape(-1)])              # (9*C*C + C,)

    # ---- layout glue: pad spatially, flatten per image, pad lanes ----
    Lout = _round_up(H * Wp, 128)                 # lane-dense output length
    Lin = _round_up(Lout + 2 * Wp + 2, 128)       # covers max tap offset
    Lin = max(Lin, _round_up(Hp * Wp, 128))

    x_pad = jnp.pad(x_nchw.astype(jnp.float32),
                    ((0, 0), (0, 0), (1, 1), (1, 1)))     # (N, C, Hp, Wp)
    x_flat = x_pad.reshape(N, C, Hp * Wp)
    x_in = jnp.pad(x_flat, ((0, 0), (0, 0), (0, Lin - Hp * Wp)))   # (N, C, Lin)

    kernel = _make_score_kernel(C, Wp, Lout)

    out = pl.pallas_call(
        kernel,
        out_shape=jax.ShapeDtypeStruct((N, C, Lout), jnp.float32),
        grid_spec=pltpu.PrefetchScalarGridSpec(
            num_scalar_prefetch=0,
            grid=(N,),
            in_specs=[
                pl.BlockSpec(memory_space=pltpu.SMEM),           # folded w & b
                pl.BlockSpec((None, C, Lin), lambda n: (n, 0, 0)),   # one image
            ],
            out_specs=pl.BlockSpec((None, C, Lout), lambda n: (n, 0, 0)),
        ),
        compiler_params=pltpu.CompilerParams(
            dimension_semantics=("parallel",)),      # batch shards across TCs
    )(wb, x_in)

    # crop padded-flat coords back to NCHW: k = h*Wp + w  ->  (h, w), w < W
    out_nchw = out[:, :, :H * Wp].reshape(N, C, H, Wp)[:, :, :, :W]
    return out_nchw


def _reference(x_nchw, sigma, w_oihw, bias):
    den = lax.conv_general_dilated(
        x_nchw, w_oihw, window_strides=(1, 1), padding="SAME",
        dimension_numbers=("NCHW", "OIHW", "NCHW"))
    den = den + bias[None, :, None, None]
    return (x_nchw - den) / (sigma * sigma)


if __name__ == "__main__":
    key = jax.random.PRNGKey(0)
    k_x, k_w, k_b = jax.random.split(key, 3)

    N, C, H, W = 2, 4, 16, 16
    sigma = 0.1

    x = jax.random.normal(k_x, (N, C, H, W), dtype=jnp.float32)
    # deterministic synthetic denoiser weights (3x3 conv, C->C)
    w = 0.05 * jax.random.normal(k_w, (C, C, 3, 3), dtype=jnp.float32)
    b = 0.01 * jax.random.normal(k_b, (C,), dtype=jnp.float32)

    out = score_prior_forward(x, sigma, w, b)
    out = jax.block_until_ready(out)

    ref = _reference(x, sigma, w, b)
    assert out.shape == (N, C, H, W)
    assert jnp.allclose(out, ref, atol=1e-3, rtol=1e-3), "mismatch vs JAX reference"

    print("KERNEL_OK")
</pallas_src>

<mosaic_0001>
module attributes {stable_mosaic.version = 11 : i64} {
  func.func @kernel(%arg0: i32, %arg1: memref<148xf32, #tpu.memory_space<smem>>, %arg2: memref<1x4x512xf32, #tpu.memory_space<vmem>>, %arg3: memref<1x4x384xf32, #tpu.memory_space<vmem>>) attributes {dimension_semantics = [#tpu.dimension_semantics<parallel>], iteration_bounds = array<i64: 2>, scalar_prefetch = 0 : i64, scratch_operands = 0 : i64, tpu.core_type = #tpu.core_type<tc>, window_params = [{transform_indices = @transform_0, window_bounds = array<i64: 148>}, {transform_indices = @transform_1, window_bounds = array<i64: 1, 4, 512>}, {transform_indices = @transform_2, window_bounds = array<i64: 1, 4, 384>}]} {
    %c144 = arith.constant 144 : index
    %0 = memref.load %arg1[%c144] : memref<148xf32, #tpu.memory_space<smem>>
    %1 = vector.broadcast %0 : f32 to vector<1x384xf32>
    %c145 = arith.constant 145 : index
    %2 = memref.load %arg1[%c145] : memref<148xf32, #tpu.memory_space<smem>>
    %3 = vector.broadcast %2 : f32 to vector<1x384xf32>
    %c146 = arith.constant 146 : index
    %4 = memref.load %arg1[%c146] : memref<148xf32, #tpu.memory_space<smem>>
    %5 = vector.broadcast %4 : f32 to vector<1x384xf32>
    %c147 = arith.constant 147 : index
    %6 = memref.load %arg1[%c147] : memref<148xf32, #tpu.memory_space<smem>>
    %7 = vector.broadcast %6 : f32 to vector<1x384xf32>
    %c0 = arith.constant 0 : index
    %c0_0 = arith.constant 0 : index
    %c0_1 = arith.constant 0 : index
    %8 = vector.load %arg2[%c0, %c0_0, %c0_1] : memref<1x4x512xf32, #tpu.memory_space<vmem>>, vector<1x1x384xf32>
    %9 = vector.shape_cast %8 : vector<1x1x384xf32> to vector<1x384xf32>
    %c0_2 = arith.constant 0 : index
    %10 = memref.load %arg1[%c0_2] : memref<148xf32, #tpu.memory_space<smem>>
    %11 = vector.broadcast %10 : f32 to vector<1x384xf32>
    %12 = arith.mulf %11, %9 : vector<1x384xf32>
    %13 = arith.addf %1, %12 : vector<1x384xf32>
    %c1 = arith.constant 1 : index
    %14 = memref.load %arg1[%c1] : memref<148xf32, #tpu.memory_space<smem>>
    %15 = vector.broadcast %14 : f32 to vector<1x384xf32>
    %16 = arith.mulf %15, %9 : vector<1x384xf32>
    %17 = arith.addf %3, %16 : vector<1x384xf32>
    %c2 = arith.constant 2 : index
    %18 = memref.load %arg1[%c2] : memref<148xf32, #tpu.memory_space<smem>>
    %19 = vector.broadcast %18 : f32 to vector<1x384xf32>
    %20 = arith.mulf %19, %9 : vector<1x384xf32>
    %21 = arith.addf %5, %20 : vector<1x384xf32>
    %c3 = arith.constant 3 : index
    %22 = memref.load %arg1[%c3] : memref<148xf32, #tpu.memory_space<smem>>
    %23 = vector.broadcast %22 : f32 to vector<1x384xf32>
    %24 = arith.mulf %23, %9 : vector<1x384xf32>
    %25 = arith.addf %7, %24 : vector<1x384xf32>
    %c0_3 = arith.constant 0 : index
    %c1_4 = arith.constant 1 : index
    %c0_5 = arith.constant 0 : index
    %26 = vector.load %arg2[%c0_3, %c1_4, %c0_5] : memref<1x4x512xf32, #tpu.memory_space<vmem>>, vector<1x1x384xf32>
    %27 = vector.shape_cast %26 : vector<1x1x384xf32> to vector<1x384xf32>
    %c4 = arith.constant 4 : index
    %28 = memref.load %arg1[%c4] : memref<148xf32, #tpu.memory_space<smem>>
    %29 = vector.broadcast %28 : f32 to vector<1x384xf32>
    %30 = arith.mulf %29, %27 : vector<1x384xf32>
    %31 = arith.addf %13, %30 : vector<1x384xf32>
    %c5 = arith.constant 5 : index
    %32 = memref.load %arg1[%c5] : memref<148xf32, #tpu.memory_space<smem>>
    %33 = vector.broadcast %32 : f32 to vector<1x384xf32>
    %34 = arith.mulf %33, %27 : vector<1x384xf32>
    %35 = arith.addf %17, %34 : vector<1x384xf32>
    %c6 = arith.constant 6 : index
    %36 = memref.load %arg1[%c6] : memref<148xf32, #tpu.memory_space<smem>>
    %37 = vector.broadcast %36 : f32 to vector<1x384xf32>
    %38 = arith.mulf %37, %27 : vector<1x384xf32>
    %39 = arith.addf %21, %38 : vector<1x384xf32>
    %c7 = arith.constant 7 : index
    %40 = memref.load %arg1[%c7] : memref<148xf32, #tpu.memory_space<smem>>
    %41 = vector.broadcast %40 : f32 to vector<1x384xf32>
    %42 = arith.mulf %41, %27 : vector<1x384xf32>
    %43 = arith.addf %25, %42 : vector<1x384xf32>
    %c0_6 = arith.constant 0 : index
    %c2_7 = arith.constant 2 : index
    %c0_8 = arith.constant 0 : index
    %44 = vector.load %arg2[%c0_6, %c2_7, %c0_8] : memref<1x4x512xf32, #tpu.memory_space<vmem>>, vector<1x1x384xf32>
    %45 = vector.shape_cast %44 : vector<1x1x384xf32> to vector<1x384xf32>
    %c8 = arith.constant 8 : index
    %46 = memref.load %arg1[%c8] : memref<148xf32, #tpu.memory_space<smem>>
    %47 = vector.broadcast %46 : f32 to vector<1x384xf32>
    %48 = arith.mulf %47, %45 : vector<1x384xf32>
    %49 = arith.addf %31, %48 : vector<1x384xf32>
    %c9 = arith.constant 9 : index
    %50 = memref.load %arg1[%c9] : memref<148xf32, #tpu.memory_space<smem>>
    %51 = vector.broadcast %50 : f32 to vector<1x384xf32>
    %52 = arith.mulf %51, %45 : vector<1x384xf32>
    %53 = arith.addf %35, %52 : vector<1x384xf32>
    %c10 = arith.constant 10 : index
    %54 = memref.load %arg1[%c10] : memref<148xf32, #tpu.memory_space<smem>>
    %55 = vector.broadcast %54 : f32 to vector<1x384xf32>
    %56 = arith.mulf %55, %45 : vector<1x384xf32>
    %57 = arith.addf %39, %56 : vector<1x384xf32>
    %c11 = arith.constant 11 : index
    %58 = memref.load %arg1[%c11] : memref<148xf32, #tpu.memory_space<smem>>
    %59 = vector.broadcast %58 : f32 to vector<1x384xf32>
    %60 = arith.mulf %59, %45 : vector<1x384xf32>
    %61 = arith.addf %43, %60 : vector<1x384xf32>
    %c0_9 = arith.constant 0 : index
    %c3_10 = arith.constant 3 : index
    %c0_11 = arith.constant 0 : index
    %62 = vector.load %arg2[%c0_9, %c3_10, %c0_11] : memref<1x4x512xf32, #tpu.memory_space<vmem>>, vector<1x1x384xf32>
    %63 = vector.shape_cast %62 : vector<1x1x384xf32> to vector<1x384xf32>
    %c12 = arith.constant 12 : index
    %64 = memref.load %arg1[%c12] : memref<148xf32, #tpu.memory_space<smem>>
    %65 = vector.broadcast %64 : f32 to vector<1x384xf32>
    %66 = arith.mulf %65, %63 : vector<1x384xf32>
    %67 = arith.addf %49, %66 : vector<1x384xf32>
    %c13 = arith.constant 13 : index
    %68 = memref.load %arg1[%c13] : memref<148xf32, #tpu.memory_space<smem>>
    %69 = vector.broadcast %68 : f32 to vector<1x384xf32>
    %70 = arith.mulf %69, %63 : vector<1x384xf32>
    %71 = arith.addf %53, %70 : vector<1x384xf32>
    %c14 = arith.constant 14 : index
    %72 = memref.load %arg1[%c14] : memref<148xf32, #tpu.memory_space<smem>>
    %73 = vector.broadcast %72 : f32 to vector<1x384xf32>
    %74 = arith.mulf %73, %63 : vector<1x384xf32>
    %75 = arith.addf %57, %74 : vector<1x384xf32>
    %c15 = arith.constant 15 : index
    %76 = memref.load %arg1[%c15] : memref<148xf32, #tpu.memory_space<smem>>
    %77 = vector.broadcast %76 : f32 to vector<1x384xf32>
    %78 = arith.mulf %77, %63 : vector<1x384xf32>
    %79 = arith.addf %61, %78 : vector<1x384xf32>
    %c0_12 = arith.constant 0 : index
    %c0_13 = arith.constant 0 : index
    %c1_14 = arith.constant 1 : index
    %80 = vector.load %arg2[%c0_12, %c0_13, %c1_14] : memref<1x4x512xf32, #tpu.memory_space<vmem>>, vector<1x1x384xf32>
    %81 = vector.shape_cast %80 : vector<1x1x384xf32> to vector<1x384xf32>
    %c16 = arith.constant 16 : index
    %82 = memref.load %arg1[%c16] : memref<148xf32, #tpu.memory_space<smem>>
    %83 = vector.broadcast %82 : f32 to vector<1x384xf32>
    %84 = arith.mulf %83, %81 : vector<1x384xf32>
    %85 = arith.addf %67, %84 : vector<1x384xf32>
    %c17 = arith.constant 17 : index
    %86 = memref.load %arg1[%c17] : memref<148xf32, #tpu.memory_space<smem>>
    %87 = vector.broadcast %86 : f32 to vector<1x384xf32>
    %88 = arith.mulf %87, %81 : vector<1x384xf32>
    %89 = arith.addf %71, %88 : vector<1x384xf32>
    %c18 = arith.constant 18 : index
    %90 = memref.load %arg1[%c18] : memref<148xf32, #tpu.memory_space<smem>>
    %91 = vector.broadcast %90 : f32 to vector<1x384xf32>
    %92 = arith.mulf %91, %81 : vector<1x384xf32>
    %93 = arith.addf %75, %92 : vector<1x384xf32>
    %c19 = arith.constant 19 : index
    %94 = memref.load %arg1[%c19] : memref<148xf32, #tpu.memory_space<smem>>
    %95 = vector.broadcast %94 : f32 to vector<1x384xf32>
    %96 = arith.mulf %95, %81 : vector<1x384xf32>
    %97 = arith.addf %79, %96 : vector<1x384xf32>
    %c0_15 = arith.constant 0 : index
    %c1_16 = arith.constant 1 : index
    %c1_17 = arith.constant 1 : index
    %98 = vector.load %arg2[%c0_15, %c1_16, %c1_17] : memref<1x4x512xf32, #tpu.memory_space<vmem>>, vector<1x1x384xf32>
    %99 = vector.shape_cast %98 : vector<1x1x384xf32> to vector<1x384xf32>
    %c20 = arith.constant 20 : index
    %100 = memref.load %arg1[%c20] : memref<148xf32, #tpu.memory_space<smem>>
    %101 = vector.broadcast %100 : f32 to vector<1x384xf32>
    %102 = arith.mulf %101, %99 : vector<1x384xf32>
    %103 = arith.addf %85, %102 : vector<1x384xf32>
    %c21 = arith.constant 21 : index
    %104 = memref.load %arg1[%c21] : memref<148xf32, #tpu.memory_space<smem>>
    %105 = vector.broadcast %104 : f32 to vector<1x384xf32>
    %106 = arith.mulf %105, %99 : vector<1x384xf32>
    %107 = arith.addf %89, %106 : vector<1x384xf32>
    %c22 = arith.constant 22 : index
    %108 = memref.load %arg1[%c22] : memref<148xf32, #tpu.memory_space<smem>>
    %109 = vector.broadcast %108 : f32 to vector<1x384xf32>
    %110 = arith.mulf %109, %99 : vector<1x384xf32>
    %111 = arith.addf %93, %110 : vector<1x384xf32>
    %c23 = arith.constant 23 : index
    %112 = memref.load %arg1[%c23] : memref<148xf32, #tpu.memory_space<smem>>
    %113 = vector.broadcast %112 : f32 to vector<1x384xf32>
    %114 = arith.mulf %113, %99 : vector<1x384xf32>
    %115 = arith.addf %97, %114 : vector<1x384xf32>
    %c0_18 = arith.constant 0 : index
    %c2_19 = arith.constant 2 : index
    %c1_20 = arith.constant 1 : index
    %116 = vector.load %arg2[%c0_18, %c2_19, %c1_20] : memref<1x4x512xf32, #tpu.memory_space<vmem>>, vector<1x1x384xf32>
    %117 = vector.shape_cast %116 : vector<1x1x384xf32> to vector<1x384xf32>
    %c24 = arith.constant 24 : index
    %118 = memref.load %arg1[%c24] : memref<148xf32, #tpu.memory_space<smem>>
    %119 = vector.broadcast %118 : f32 to vector<1x384xf32>
    %120 = arith.mulf %119, %117 : vector<1x384xf32>
    %121 = arith.addf %103, %120 : vector<1x384xf32>
    %c25 = arith.constant 25 : index
    %122 = memref.load %arg1[%c25] : memref<148xf32, #tpu.memory_space<smem>>
    %123 = vector.broadcast %122 : f32 to vector<1x384xf32>
    %124 = arith.mulf %123, %117 : vector<1x384xf32>
    %125 = arith.addf %107, %124 : vector<1x384xf32>
    %c26 = arith.constant 26 : index
    %126 = memref.load %arg1[%c26] : memref<148xf32, #tpu.memory_space<smem>>
    %127 = vector.broadcast %126 : f32 to vector<1x384xf32>
    %128 = arith.mulf %127, %117 : vector<1x384xf32>
    %129 = arith.addf %111, %128 : vector<1x384xf32>
    %c27 = arith.constant 27 : index
    %130 = memref.load %arg1[%c27] : memref<148xf32, #tpu.memory_space<smem>>
    %131 = vector.broadcast %130 : f32 to vector<1x384xf32>
    %132 = arith.mulf %131, %117 : vector<1x384xf32>
    %133 = arith.addf %115, %132 : vector<1x384xf32>
    %c0_21 = arith.constant 0 : index
    %c3_22 = arith.constant 3 : index
    %c1_23 = arith.constant 1 : index
    %134 = vector.load %arg2[%c0_21, %c3_22, %c1_23] : memref<1x4x512xf32, #tpu.memory_space<vmem>>, vector<1x1x384xf32>
    %135 = vector.shape_cast %134 : vector<1x1x384xf32> to vector<1x384xf32>
    %c28 = arith.constant 28 : index
    %136 = memref.load %arg1[%c28] : memref<148xf32, #tpu.memory_space<smem>>
    %137 = vector.broadcast %136 : f32 to vector<1x384xf32>
    %138 = arith.mulf %137, %135 : vector<1x384xf32>
    %139 = arith.addf %121, %138 : vector<1x384xf32>
    %c29 = arith.constant 29 : index
    %140 = memref.load %arg1[%c29] : memref<148xf32, #tpu.memory_space<smem>>
    %141 = vector.broadcast %140 : f32 to vector<1x384xf32>
    %142 = arith.mulf %141, %135 : vector<1x384xf32>
    %143 = arith.addf %125, %142 : vector<1x384xf32>
    %c30 = arith.constant 30 : index
    %144 = memref.load %arg1[%c30] : memref<148xf32, #tpu.memory_space<smem>>
    %145 = vector.broadcast %144 : f32 to vector<1x384xf32>
    %146 = arith.mulf %145, %135 : vector<1x384xf32>
    %147 = arith.addf %129, %146 : vector<1x384xf32>
    %c31 = arith.constant 31 : index
    %148 = memref.load %arg1[%c31] : memref<148xf32, #tpu.memory_space<smem>>
    %149 = vector.broadcast %148 : f32 to vector<1x384xf32>
    %150 = arith.mulf %149, %135 : vector<1x384xf32>
    %151 = arith.addf %133, %150 : vector<1x384xf32>
    %c0_24 = arith.constant 0 : index
    %c0_25 = arith.constant 0 : index
    %c2_26 = arith.constant 2 : index
    %152 = vector.load %arg2[%c0_24, %c0_25, %c2_26] : memref<1x4x512xf32, #tpu.memory_space<vmem>>, vector<1x1x384xf32>
    %153 = vector.shape_cast %152 : vector<1x1x384xf32> to vector<1x384xf32>
    %c32 = arith.constant 32 : index
    %154 = memref.load %arg1[%c32] : memref<148xf32, #tpu.memory_space<smem>>
    %155 = vector.broadcast %154 : f32 to vector<1x384xf32>
    %156 = arith.mulf %155, %153 : vector<1x384xf32>
    %157 = arith.addf %139, %156 : vector<1x384xf32>
    %c33 = arith.constant 33 : index
    %158 = memref.load %arg1[%c33] : memref<148xf32, #tpu.memory_space<smem>>
    %159 = vector.broadcast %158 : f32 to vector<1x384xf32>
    %160 = arith.mulf %159, %153 : vector<1x384xf32>
    %161 = arith.addf %143, %160 : vector<1x384xf32>
    %c34 = arith.constant 34 : index
    %162 = memref.load %arg1[%c34] : memref<148xf32, #tpu.memory_space<smem>>
    %163 = vector.broadcast %162 : f32 to vector<1x384xf32>
    %164 = arith.mulf %163, %153 : vector<1x384xf32>
    %165 = arith.addf %147, %164 : vector<1x384xf32>
    %c35 = arith.constant 35 : index
    %166 = memref.load %arg1[%c35] : memref<148xf32, #tpu.memory_space<smem>>
    %167 = vector.broadcast %166 : f32 to vector<1x384xf32>
    %168 = arith.mulf %167, %153 : vector<1x384xf32>
    %169 = arith.addf %151, %168 : vector<1x384xf32>
    %c0_27 = arith.constant 0 : index
    %c1_28 = arith.constant 1 : index
    %c2_29 = arith.constant 2 : index
    %170 = vector.load %arg2[%c0_27, %c1_28, %c2_29] : memref<1x4x512xf32, #tpu.memory_space<vmem>>, vector<1x1x384xf32>
    %171 = vector.shape_cast %170 : vector<1x1x384xf32> to vector<1x384xf32>
    %c36 = arith.constant 36 : index
    %172 = memref.load %arg1[%c36] : memref<148xf32, #tpu.memory_space<smem>>
    %173 = vector.broadcast %172 : f32 to vector<1x384xf32>
    %174 = arith.mulf %173, %171 : vector<1x384xf32>
    %175 = arith.addf %157, %174 : vector<1x384xf32>
    %c37 = arith.constant 37 : index
    %176 = memref.load %arg1[%c37] : memref<148xf32, #tpu.memory_space<smem>>
    %177 = vector.broadcast %176 : f32 to vector<1x384xf32>
    %178 = arith.mulf %177, %171 : vector<1x384xf32>
    %179 = arith.addf %161, %178 : vector<1x384xf32>
    %c38 = arith.constant 38 : index
    %180 = memref.load %arg1[%c38] : memref<148xf32, #tpu.memory_space<smem>>
    %181 = vector.broadcast %180 : f32 to vector<1x384xf32>
    %182 = arith.mulf %181, %171 : vector<1x384xf32>
    %183 = arith.addf %165, %182 : vector<1x384xf32>
    %c39 = arith.constant 39 : index
    %184 = memref.load %arg1[%c39] : memref<148xf32, #tpu.memory_space<smem>>
    %185 = vector.broadcast %184 : f32 to vector<1x384xf32>
    %186 = arith.mulf %185, %171 : vector<1x384xf32>
    %187 = arith.addf %169, %186 : vector<1x384xf32>
    %c0_30 = arith.constant 0 : index
    %c2_31 = arith.constant 2 : index
    %c2_32 = arith.constant 2 : index
    %188 = vector.load %arg2[%c0_30, %c2_31, %c2_32] : memref<1x4x512xf32, #tpu.memory_space<vmem>>, vector<1x1x384xf32>
    %189 = vector.shape_cast %188 : vector<1x1x384xf32> to vector<1x384xf32>
    %c40 = arith.constant 40 : index
    %190 = memref.load %arg1[%c40] : memref<148xf32, #tpu.memory_space<smem>>
    %191 = vector.broadcast %190 : f32 to vector<1x384xf32>
    %192 = arith.mulf %191, %189 : vector<1x384xf32>
    %193 = arith.addf %175, %192 : vector<1x384xf32>
    %c41 = arith.constant 41 : index
    %194 = memref.load %arg1[%c41] : memref<148xf32, #tpu.memory_space<smem>>
    %195 = vector.broadcast %194 : f32 to vector<1x384xf32>
    %196 = arith.mulf %195, %189 : vector<1x384xf32>
    %197 = arith.addf %179, %196 : vector<1x384xf32>
    %c42 = arith.constant 42 : index
    %198 = memref.load %arg1[%c42] : memref<148xf32, #tpu.memory_space<smem>>
    %199 = vector.broadcast %198 : f32 to vector<1x384xf32>
    %200 = arith.mulf %199, %189 : vector<1x384xf32>
    %201 = arith.addf %183, %200 : vector<1x384xf32>
    %c43 = arith.constant 43 : index
    %202 = memref.load %arg1[%c43] : memref<148xf32, #tpu.memory_space<smem>>
    %203 = vector.broadcast %202 : f32 to vector<1x384xf32>
    %204 = arith.mulf %203, %189 : vector<1x384xf32>
    %205 = arith.addf %187, %204 : vector<1x384xf32>
    %c0_33 = arith.constant 0 : index
    %c3_34 = arith.constant 3 : index
    %c2_35 = arith.constant 2 : index
    %206 = vector.load %arg2[%c0_33, %c3_34, %c2_35] : memref<1x4x512xf32, #tpu.memory_space<vmem>>, vector<1x1x384xf32>
    %207 = vector.shape_cast %206 : vector<1x1x384xf32> to vector<1x384xf32>
    %c44 = arith.constant 44 : index
    %208 = memref.load %arg1[%c44] : memref<148xf32, #tpu.memory_space<smem>>
    %209 = vector.broadcast %208 : f32 to vector<1x384xf32>
    %210 = arith.mulf %209, %207 : vector<1x384xf32>
    %211 = arith.addf %193, %210 : vector<1x384xf32>
    %c45 = arith.constant 45 : index
    %212 = memref.load %arg1[%c45] : memref<148xf32, #tpu.memory_space<smem>>
    %213 = vector.broadcast %212 : f32 to vector<1x384xf32>
    %214 = arith.mulf %213, %207 : vector<1x384xf32>
    %215 = arith.addf %197, %214 : vector<1x384xf32>
    %c46 = arith.constant 46 : index
    %216 = memref.load %arg1[%c46] : memref<148xf32, #tpu.memory_space<smem>>
    %217 = vector.broadcast %216 : f32 to vector<1x384xf32>
    %218 = arith.mulf %217, %207 : vector<1x384xf32>
    %219 = arith.addf %201, %218 : vector<1x384xf32>
    %c47 = arith.constant 47 : index
    %220 = memref.load %arg1[%c47] : memref<148xf32, #tpu.memory_space<smem>>
    %221 = vector.broadcast %220 : f32 to vector<1x384xf32>
    %222 = arith.mulf %221, %207 : vector<1x384xf32>
    %223 = arith.addf %205, %222 : vector<1x384xf32>
    %c0_36 = arith.constant 0 : index
    %c0_37 = arith.constant 0 : index
    %c18_38 = arith.constant 18 : index
    %224 = vector.load %arg2[%c0_36, %c0_37, %c18_38] : memref<1x4x512xf32, #tpu.memory_space<vmem>>, vector<1x1x384xf32>
    %225 = vector.shape_cast %224 : vector<1x1x384xf32> to vector<1x384xf32>
    %c48 = arith.constant 48 : index
    %226 = memref.load %arg1[%c48] : memref<148xf32, #tpu.memory_space<smem>>
    %227 = vector.broadcast %226 : f32 to vector<1x384xf32>
    %228 = arith.mulf %227, %225 : vector<1x384xf32>
    %229 = arith.addf %211, %228 : vector<1x384xf32>
    %c49 = arith.constant 49 : index
    %230 = memref.load %arg1[%c49] : memref<148xf32, #tpu.memory_space<smem>>
    %231 = vector.broadcast %230 : f32 to vector<1x384xf32>
    %232 = arith.mulf %231, %225 : vector<1x384xf32>
    %233 = arith.addf %215, %232 : vector<1x384xf32>
    %c50 = arith.constant 50 : index
    %234 = memref.load %arg1[%c50] : memref<148xf32, #tpu.memory_space<smem>>
    %235 = vector.broadcast %234 : f32 to vector<1x384xf32>
    %236 = arith.mulf %235, %225 : vector<1x384xf32>
    %237 = arith.addf %219, %236 : vector<1x384xf32>
    %c51 = arith.constant 51 : index
    %238 = memref.load %arg1[%c51] : memref<148xf32, #tpu.memory_space<smem>>
    %239 = vector.broadcast %238 : f32 to vector<1x384xf32>
    %240 = arith.mulf %239, %225 : vector<1x384xf32>
    %241 = arith.addf %223, %240 : vector<1x384xf32>
    %c0_39 = arith.constant 0 : index
    %c1_40 = arith.constant 1 : index
    %c18_41 = arith.constant 18 : index
    %242 = vector.load %arg2[%c0_39, %c1_40, %c18_41] : memref<1x4x512xf32, #tpu.memory_space<vmem>>, vector<1x1x384xf32>
    %243 = vector.shape_cast %242 : vector<1x1x384xf32> to vector<1x384xf32>
    %c52 = arith.constant 52 : index
    %244 = memref.load %arg1[%c52] : memref<148xf32, #tpu.memory_space<smem>>
    %245 = vector.broadcast %244 : f32 to vector<1x384xf32>
    %246 = arith.mulf %245, %243 : vector<1x384xf32>
    %247 = arith.addf %229, %246 : vector<1x384xf32>
    %c53 = arith.constant 53 : index
    %248 = memref.load %arg1[%c53] : memref<148xf32, #tpu.memory_space<smem>>
    %249 = vector.broadcast %248 : f32 to vector<1x384xf32>
    %250 = arith.mulf %249, %243 : vector<1x384xf32>
    %251 = arith.addf %233, %250 : vector<1x384xf32>
    %c54 = arith.constant 54 : index
    %252 = memref.load %arg1[%c54] : memref<148xf32, #tpu.memory_space<smem>>
    %253 = vector.broadcast %252 : f32 to vector<1x384xf32>
    %254 = arith.mulf %253, %243 : vector<1x384xf32>
    %255 = arith.addf %237, %254 : vector<1x384xf32>
    %c55 = arith.constant 55 : index
    %256 = memref.load %arg1[%c55] : memref<148xf32, #tpu.memory_space<smem>>
    %257 = vector.broadcast %256 : f32 to vector<1x384xf32>
    %258 = arith.mulf %257, %243 : vector<1x384xf32>
    %259 = arith.addf %241, %258 : vector<1x384xf32>
    %c0_42 = arith.constant 0 : index
    %c2_43 = arith.constant 2 : index
    %c18_44 = arith.constant 18 : index
    %260 = vector.load %arg2[%c0_42, %c2_43, %c18_44] : memref<1x4x512xf32, #tpu.memory_space<vmem>>, vector<1x1x384xf32>
    %261 = vector.shape_cast %260 : vector<1x1x384xf32> to vector<1x384xf32>
    %c56 = arith.constant 56 : index
    %262 = memref.load %arg1[%c56] : memref<148xf32, #tpu.memory_space<smem>>
    %263 = vector.broadcast %262 : f32 to vector<1x384xf32>
    %264 = arith.mulf %263, %261 : vector<1x384xf32>
    %265 = arith.addf %247, %264 : vector<1x384xf32>
    %c57 = arith.constant 57 : index
    %266 = memref.load %arg1[%c57] : memref<148xf32, #tpu.memory_space<smem>>
    %267 = vector.broadcast %266 : f32 to vector<1x384xf32>
    %268 = arith.mulf %267, %261 : vector<1x384xf32>
    %269 = arith.addf %251, %268 : vector<1x384xf32>
    %c58 = arith.constant 58 : index
    %270 = memref.load %arg1[%c58] : memref<148xf32, #tpu.memory_space<smem>>
    %271 = vector.broadcast %270 : f32 to vector<1x384xf32>
    %272 = arith.mulf %271, %261 : vector<1x384xf32>
    %273 = arith.addf %255, %272 : vector<1x384xf32>
    %c59 = arith.constant 59 : index
    %274 = memref.load %arg1[%c59] : memref<148xf32, #tpu.memory_space<smem>>
    %275 = vector.broadcast %274 : f32 to vector<1x384xf32>
    %276 = arith.mulf %275, %261 : vector<1x384xf32>
    %277 = arith.addf %259, %276 : vector<1x384xf32>
    %c0_45 = arith.constant 0 : index
    %c3_46 = arith.constant 3 : index
    %c18_47 = arith.constant 18 : index
    %278 = vector.load %arg2[%c0_45, %c3_46, %c18_47] : memref<1x4x512xf32, #tpu.memory_space<vmem>>, vector<1x1x384xf32>
    %279 = vector.shape_cast %278 : vector<1x1x384xf32> to vector<1x384xf32>
    %c60 = arith.constant 60 : index
    %280 = memref.load %arg1[%c60] : memref<148xf32, #tpu.memory_space<smem>>
    %281 = vector.broadcast %280 : f32 to vector<1x384xf32>
    %282 = arith.mulf %281, %279 : vector<1x384xf32>
    %283 = arith.addf %265, %282 : vector<1x384xf32>
    %c61 = arith.constant 61 : index
    %284 = memref.load %arg1[%c61] : memref<148xf32, #tpu.memory_space<smem>>
    %285 = vector.broadcast %284 : f32 to vector<1x384xf32>
    %286 = arith.mulf %285, %279 : vector<1x384xf32>
    %287 = arith.addf %269, %286 : vector<1x384xf32>
    %c62 = arith.constant 62 : index
    %288 = memref.load %arg1[%c62] : memref<148xf32, #tpu.memory_space<smem>>
    %289 = vector.broadcast %288 : f32 to vector<1x384xf32>
    %290 = arith.mulf %289, %279 : vector<1x384xf32>
    %291 = arith.addf %273, %290 : vector<1x384xf32>
    %c63 = arith.constant 63 : index
    %292 = memref.load %arg1[%c63] : memref<148xf32, #tpu.memory_space<smem>>
    %293 = vector.broadcast %292 : f32 to vector<1x384xf32>
    %294 = arith.mulf %293, %279 : vector<1x384xf32>
    %295 = arith.addf %277, %294 : vector<1x384xf32>
    %c0_48 = arith.constant 0 : index
    %c0_49 = arith.constant 0 : index
    %c19_50 = arith.constant 19 : index
    %296 = vector.load %arg2[%c0_48, %c0_49, %c19_50] : memref<1x4x512xf32, #tpu.memory_space<vmem>>, vector<1x1x384xf32>
    %297 = vector.shape_cast %296 : vector<1x1x384xf32> to vector<1x384xf32>
    %c64 = arith.constant 64 : index
    %298 = memref.load %arg1[%c64] : memref<148xf32, #tpu.memory_space<smem>>
    %299 = vector.broadcast %298 : f32 to vector<1x384xf32>
    %300 = arith.mulf %299, %297 : vector<1x384xf32>
    %301 = arith.addf %283, %300 : vector<1x384xf32>
    %c65 = arith.constant 65 : index
    %302 = memref.load %arg1[%c65] : memref<148xf32, #tpu.memory_space<smem>>
    %303 = vector.broadcast %302 : f32 to vector<1x384xf32>
    %304 = arith.mulf %303, %297 : vector<1x384xf32>
    %305 = arith.addf %287, %304 : vector<1x384xf32>
    %c66 = arith.constant 66 : index
    %306 = memref.load %arg1[%c66] : memref<148xf32, #tpu.memory_space<smem>>
    %307 = vector.broadcast %306 : f32 to vector<1x384xf32>
    %308 = arith.mulf %307, %297 : vector<1x384xf32>
    %309 = arith.addf %291, %308 : vector<1x384xf32>
    %c67 = arith.constant 67 : index
    %310 = memref.load %arg1[%c67] : memref<148xf32, #tpu.memory_space<smem>>
    %311 = vector.broadcast %310 : f32 to vector<1x384xf32>
    %312 = arith.mulf %311, %297 : vector<1x384xf32>
    %313 = arith.addf %295, %312 : vector<1x384xf32>
    %c0_51 = arith.constant 0 : index
    %c1_52 = arith.constant 1 : index
    %c19_53 = arith.constant 19 : index
    %314 = vector.load %arg2[%c0_51, %c1_52, %c19_53] : memref<1x4x512xf32, #tpu.memory_space<vmem>>, vector<1x1x384xf32>
    %315 = vector.shape_cast %314 : vector<1x1x384xf32> to vector<1x384xf32>
    %c68 = arith.constant 68 : index
    %316 = memref.load %arg1[%c68] : memref<148xf32, #tpu.memory_space<smem>>
    %317 = vector.broadcast %316 : f32 to vector<1x384xf32>
    %318 = arith.mulf %317, %315 : vector<1x384xf32>
    %319 = arith.addf %301, %318 : vector<1x384xf32>
    %c69 = arith.constant 69 : index
    %320 = memref.load %arg1[%c69] : memref<148xf32, #tpu.memory_space<smem>>
    %321 = vector.broadcast %320 : f32 to vector<1x384xf32>
    %322 = arith.mulf %321, %315 : vector<1x384xf32>
    %323 = arith.addf %305, %322 : vector<1x384xf32>
    %c70 = arith.constant 70 : index
    %324 = memref.load %arg1[%c70] : memref<148xf32, #tpu.memory_space<smem>>
    %325 = vector.broadcast %324 : f32 to vector<1x384xf32>
    %326 = arith.mulf %325, %315 : vector<1x384xf32>
    %327 = arith.addf %309, %326 : vector<1x384xf32>
    %c71 = arith.constant 71 : index
    %328 = memref.load %arg1[%c71] : memref<148xf32, #tpu.memory_space<smem>>
    %329 = vector.broadcast %328 : f32 to vector<1x384xf32>
    %330 = arith.mulf %329, %315 : vector<1x384xf32>
    %331 = arith.addf %313, %330 : vector<1x384xf32>
    %c0_54 = arith.constant 0 : index
    %c2_55 = arith.constant 2 : index
    %c19_56 = arith.constant 19 : index
    %332 = vector.load %arg2[%c0_54, %c2_55, %c19_56] : memref<1x4x512xf32, #tpu.memory_space<vmem>>, vector<1x1x384xf32>
    %333 = vector.shape_cast %332 : vector<1x1x384xf32> to vector<1x384xf32>
    %c72 = arith.constant 72 : index
    %334 = memref.load %arg1[%c72] : memref<148xf32, #tpu.memory_space<smem>>
    %335 = vector.broadcast %334 : f32 to vector<1x384xf32>
    %336 = arith.mulf %335, %333 : vector<1x384xf32>
    %337 = arith.addf %319, %336 : vector<1x384xf32>
    %c73 = arith.constant 73 : index
    %338 = memref.load %arg1[%c73] : memref<148xf32, #tpu.memory_space<smem>>
    %339 = vector.broadcast %338 : f32 to vector<1x384xf32>
    %340 = arith.mulf %339, %333 : vector<1x384xf32>
    %341 = arith.addf %323, %340 : vector<1x384xf32>
    %c74 = arith.constant 74 : index
    %342 = memref.load %arg1[%c74] : memref<148xf32, #tpu.memory_space<smem>>
    %343 = vector.broadcast %342 : f32 to vector<1x384xf32>
    %344 = arith.mulf %343, %333 : vector<1x384xf32>
    %345 = arith.addf %327, %344 : vector<1x384xf32>
    %c75 = arith.constant 75 : index
    %346 = memref.load %arg1[%c75] : memref<148xf32, #tpu.memory_space<smem>>
    %347 = vector.broadcast %346 : f32 to vector<1x384xf32>
    %348 = arith.mulf %347, %333 : vector<1x384xf32>
    %349 = arith.addf %331, %348 : vector<1x384xf32>
    %c0_57 = arith.constant 0 : index
    %c3_58 = arith.constant 3 : index
    %c19_59 = arith.constant 19 : index
    %350 = vector.load %arg2[%c0_57, %c3_58, %c19_59] : memref<1x4x512xf32, #tpu.memory_space<vmem>>, vector<1x1x384xf32>
    %351 = vector.shape_cast %350 : vector<1x1x384xf32> to vector<1x384xf32>
    %c76 = arith.constant 76 : index
    %352 = memref.load %arg1[%c76] : memref<148xf32, #tpu.memory_space<smem>>
    %353 = vector.broadcast %352 : f32 to vector<1x384xf32>
    %354 = arith.mulf %353, %351 : vector<1x384xf32>
    %355 = arith.addf %337, %354 : vector<1x384xf32>
    %c77 = arith.constant 77 : index
    %356 = memref.load %arg1[%c77] : memref<148xf32, #tpu.memory_space<smem>>
    %357 = vector.broadcast %356 : f32 to vector<1x384xf32>
    %358 = arith.mulf %357, %351 : vector<1x384xf32>
    %359 = arith.addf %341, %358 : vector<1x384xf32>
    %c78 = arith.constant 78 : index
    %360 = memref.load %arg1[%c78] : memref<148xf32, #tpu.memory_space<smem>>
    %361 = vector.broadcast %360 : f32 to vector<1x384xf32>
    %362 = arith.mulf %361, %351 : vector<1x384xf32>
    %363 = arith.addf %345, %362 : vector<1x384xf32>
    %c79 = arith.constant 79 : index
    %364 = memref.load %arg1[%c79] : memref<148xf32, #tpu.memory_space<smem>>
    %365 = vector.broadcast %364 : f32 to vector<1x384xf32>
    %366 = arith.mulf %365, %351 : vector<1x384xf32>
    %367 = arith.addf %349, %366 : vector<1x384xf32>
    %c0_60 = arith.constant 0 : index
    %c0_61 = arith.constant 0 : index
    %c20_62 = arith.constant 20 : index
    %368 = vector.load %arg2[%c0_60, %c0_61, %c20_62] : memref<1x4x512xf32, #tpu.memory_space<vmem>>, vector<1x1x384xf32>
    %369 = vector.shape_cast %368 : vector<1x1x384xf32> to vector<1x384xf32>
    %c80 = arith.constant 80 : index
    %370 = memref.load %arg1[%c80] : memref<148xf32, #tpu.memory_space<smem>>
    %371 = vector.broadcast %370 : f32 to vector<1x384xf32>
    %372 = arith.mulf %371, %369 : vector<1x384xf32>
    %373 = arith.addf %355, %372 : vector<1x384xf32>
    %c81 = arith.constant 81 : index
    %374 = memref.load %arg1[%c81] : memref<148xf32, #tpu.memory_space<smem>>
    %375 = vector.broadcast %374 : f32 to vector<1x384xf32>
    %376 = arith.mulf %375, %369 : vector<1x384xf32>
    %377 = arith.addf %359, %376 : vector<1x384xf32>
    %c82 = arith.constant 82 : index
    %378 = memref.load %arg1[%c82] : memref<148xf32, #tpu.memory_space<smem>>
    %379 = vector.broadcast %378 : f32 to vector<1x384xf32>
    %380 = arith.mulf %379, %369 : vector<1x384xf32>
    %381 = arith.addf %363, %380 : vector<1x384xf32>
    %c83 = arith.constant 83 : index
    %382 = memref.load %arg1[%c83] : memref<148xf32, #tpu.memory_space<smem>>
    %383 = vector.broadcast %382 : f32 to vector<1x384xf32>
    %384 = arith.mulf %383, %369 : vector<1x384xf32>
    %385 = arith.addf %367, %384 : vector<1x384xf32>
    %c0_63 = arith.constant 0 : index
    %c1_64 = arith.constant 1 : index
    %c20_65 = arith.constant 20 : index
    %386 = vector.load %arg2[%c0_63, %c1_64, %c20_65] : memref<1x4x512xf32, #tpu.memory_space<vmem>>, vector<1x1x384xf32>
    %387 = vector.shape_cast %386 : vector<1x1x384xf32> to vector<1x384xf32>
    %c84 = arith.constant 84 : index
    %388 = memref.load %arg1[%c84] : memref<148xf32, #tpu.memory_space<smem>>
    %389 = vector.broadcast %388 : f32 to vector<1x384xf32>
    %390 = arith.mulf %389, %387 : vector<1x384xf32>
    %391 = arith.addf %373, %390 : vector<1x384xf32>
    %c85 = arith.constant 85 : index
    %392 = memref.load %arg1[%c85] : memref<148xf32, #tpu.memory_space<smem>>
    %393 = vector.broadcast %392 : f32 to vector<1x384xf32>
    %394 = arith.mulf %393, %387 : vector<1x384xf32>
    %395 = arith.addf %377, %394 : vector<1x384xf32>
    %c86 = arith.constant 86 : index
    %396 = memref.load %arg1[%c86] : memref<148xf32, #tpu.memory_space<smem>>
    %397 = vector.broadcast %396 : f32 to vector<1x384xf32>
    %398 = arith.mulf %397, %387 : vector<1x384xf32>
    %399 = arith.addf %381, %398 : vector<1x384xf32>
    %c87 = arith.constant 87 : index
    %400 = memref.load %arg1[%c87] : memref<148xf32, #tpu.memory_space<smem>>
    %401 = vector.broadcast %400 : f32 to vector<1x384xf32>
    %402 = arith.mulf %401, %387 : vector<1x384xf32>
    %403 = arith.addf %385, %402 : vector<1x384xf32>
    %c0_66 = arith.constant 0 : index
    %c2_67 = arith.constant 2 : index
    %c20_68 = arith.constant 20 : index
    %404 = vector.load %arg2[%c0_66, %c2_67, %c20_68] : memref<1x4x512xf32, #tpu.memory_space<vmem>>, vector<1x1x384xf32>
    %405 = vector.shape_cast %404 : vector<1x1x384xf32> to vector<1x384xf32>
    %c88 = arith.constant 88 : index
    %406 = memref.load %arg1[%c88] : memref<148xf32, #tpu.memory_space<smem>>
    %407 = vector.broadcast %406 : f32 to vector<1x384xf32>
    %408 = arith.mulf %407, %405 : vector<1x384xf32>
    %409 = arith.addf %391, %408 : vector<1x384xf32>
    %c89 = arith.constant 89 : index
    %410 = memref.load %arg1[%c89] : memref<148xf32, #tpu.memory_space<smem>>
    %411 = vector.broadcast %410 : f32 to vector<1x384xf32>
    %412 = arith.mulf %411, %405 : vector<1x384xf32>
    %413 = arith.addf %395, %412 : vector<1x384xf32>
    %c90 = arith.constant 90 : index
    %414 = memref.load %arg1[%c90] : memref<148xf32, #tpu.memory_space<smem>>
    %415 = vector.broadcast %414 : f32 to vector<1x384xf32>
    %416 = arith.mulf %415, %405 : vector<1x384xf32>
    %417 = arith.addf %399, %416 : vector<1x384xf32>
    %c91 = arith.constant 91 : index
    %418 = memref.load %arg1[%c91] : memref<148xf32, #tpu.memory_space<smem>>
    %419 = vector.broadcast %418 : f32 to vector<1x384xf32>
    %420 = arith.mulf %419, %405 : vector<1x384xf32>
    %421 = arith.addf %403, %420 : vector<1x384xf32>
    %c0_69 = arith.constant 0 : index
    %c3_70 = arith.constant 3 : index
    %c20_71 = arith.constant 20 : index
    %422 = vector.load %arg2[%c0_69, %c3_70, %c20_71] : memref<1x4x512xf32, #tpu.memory_space<vmem>>, vector<1x1x384xf32>
    %423 = vector.shape_cast %422 : vector<1x1x384xf32> to vector<1x384xf32>
    %c92 = arith.constant 92 : index
    %424 = memref.load %arg1[%c92] : memref<148xf32, #tpu.memory_space<smem>>
    %425 = vector.broadcast %424 : f32 to vector<1x384xf32>
    %426 = arith.mulf %425, %423 : vector<1x384xf32>
    %427 = arith.addf %409, %426 : vector<1x384xf32>
    %c93 = arith.constant 93 : index
    %428 = memref.load %arg1[%c93] : memref<148xf32, #tpu.memory_space<smem>>
    %429 = vector.broadcast %428 : f32 to vector<1x384xf32>
    %430 = arith.mulf %429, %423 : vector<1x384xf32>
    %431 = arith.addf %413, %430 : vector<1x384xf32>
    %c94 = arith.constant 94 : index
    %432 = memref.load %arg1[%c94] : memref<148xf32, #tpu.memory_space<smem>>
    %433 = vector.broadcast %432 : f32 to vector<1x384xf32>
    %434 = arith.mulf %433, %423 : vector<1x384xf32>
    %435 = arith.addf %417, %434 : vector<1x384xf32>
    %c95 = arith.constant 95 : index
    %436 = memref.load %arg1[%c95] : memref<148xf32, #tpu.memory_space<smem>>
    %437 = vector.broadcast %436 : f32 to vector<1x384xf32>
    %438 = arith.mulf %437, %423 : vector<1x384xf32>
    %439 = arith.addf %421, %438 : vector<1x384xf32>
    %c0_72 = arith.constant 0 : index
    %c0_73 = arith.constant 0 : index
    %c36_74 = arith.constant 36 : index
    %440 = vector.load %arg2[%c0_72, %c0_73, %c36_74] : memref<1x4x512xf32, #tpu.memory_space<vmem>>, vector<1x1x384xf32>
    %441 = vector.shape_cast %440 : vector<1x1x384xf32> to vector<1x384xf32>
    %c96 = arith.constant 96 : index
    %442 = memref.load %arg1[%c96] : memref<148xf32, #tpu.memory_space<smem>>
    %443 = vector.broadcast %442 : f32 to vector<1x384xf32>
    %444 = arith.mulf %443, %441 : vector<1x384xf32>
    %445 = arith.addf %427, %444 : vector<1x384xf32>
    %c97 = arith.constant 97 : index
    %446 = memref.load %arg1[%c97] : memref<148xf32, #tpu.memory_space<smem>>
    %447 = vector.broadcast %446 : f32 to vector<1x384xf32>
    %448 = arith.mulf %447, %441 : vector<1x384xf32>
    %449 = arith.addf %431, %448 : vector<1x384xf32>
    %c98 = arith.constant 98 : index
    %450 = memref.load %arg1[%c98] : memref<148xf32, #tpu.memory_space<smem>>
    %451 = vector.broadcast %450 : f32 to vector<1x384xf32>
    %452 = arith.mulf %451, %441 : vector<1x384xf32>
    %453 = arith.addf %435, %452 : vector<1x384xf32>
    %c99 = arith.constant 99 : index
    %454 = memref.load %arg1[%c99] : memref<148xf32, #tpu.memory_space<smem>>
    %455 = vector.broadcast %454 : f32 to vector<1x384xf32>
    %456 = arith.mulf %455, %441 : vector<1x384xf32>
    %457 = arith.addf %439, %456 : vector<1x384xf32>
    %c0_75 = arith.constant 0 : index
    %c1_76 = arith.constant 1 : index
    %c36_77 = arith.constant 36 : index
    %458 = vector.load %arg2[%c0_75, %c1_76, %c36_77] : memref<1x4x512xf32, #tpu.memory_space<vmem>>, vector<1x1x384xf32>
    %459 = vector.shape_cast %458 : vector<1x1x384xf32> to vector<1x384xf32>
    %c100 = arith.constant 100 : index
    %460 = memref.load %arg1[%c100] : memref<148xf32, #tpu.memory_space<smem>>
    %461 = vector.broadcast %460 : f32 to vector<1x384xf32>
    %462 = arith.mulf %461, %459 : vector<1x384xf32>
    %463 = arith.addf %445, %462 : vector<1x384xf32>
    %c101 = arith.constant 101 : index
    %464 = memref.load %arg1[%c101] : memref<148xf32, #tpu.memory_space<smem>>
    %465 = vector.broadcast %464 : f32 to vector<1x384xf32>
    %466 = arith.mulf %465, %459 : vector<1x384xf32>
    %467 = arith.addf %449, %466 : vector<1x384xf32>
    %c102 = arith.constant 102 : index
    %468 = memref.load %arg1[%c102] : memref<148xf32, #tpu.memory_space<smem>>
    %469 = vector.broadcast %468 : f32 to vector<1x384xf32>
    %470 = arith.mulf %469, %459 : vector<1x384xf32>
    %471 = arith.addf %453, %470 : vector<1x384xf32>
    %c103 = arith.constant 103 : index
    %472 = memref.load %arg1[%c103] : memref<148xf32, #tpu.memory_space<smem>>
    %473 = vector.broadcast %472 : f32 to vector<1x384xf32>
    %474 = arith.mulf %473, %459 : vector<1x384xf32>
    %475 = arith.addf %457, %474 : vector<1x384xf32>
    %c0_78 = arith.constant 0 : index
    %c2_79 = arith.constant 2 : index
    %c36_80 = arith.constant 36 : index
    %476 = vector.load %arg2[%c0_78, %c2_79, %c36_80] : memref<1x4x512xf32, #tpu.memory_space<vmem>>, vector<1x1x384xf32>
    %477 = vector.shape_cast %476 : vector<1x1x384xf32> to vector<1x384xf32>
    %c104 = arith.constant 104 : index
    %478 = memref.load %arg1[%c104] : memref<148xf32, #tpu.memory_space<smem>>
    %479 = vector.broadcast %478 : f32 to vector<1x384xf32>
    %480 = arith.mulf %479, %477 : vector<1x384xf32>
    %481 = arith.addf %463, %480 : vector<1x384xf32>
    %c105 = arith.constant 105 : index
    %482 = memref.load %arg1[%c105] : memref<148xf32, #tpu.memory_space<smem>>
    %483 = vector.broadcast %482 : f32 to vector<1x384xf32>
    %484 = arith.mulf %483, %477 : vector<1x384xf32>
    %485 = arith.addf %467, %484 : vector<1x384xf32>
    %c106 = arith.constant 106 : index
    %486 = memref.load %arg1[%c106] : memref<148xf32, #tpu.memory_space<smem>>
    %487 = vector.broadcast %486 : f32 to vector<1x384xf32>
    %488 = arith.mulf %487, %477 : vector<1x384xf32>
    %489 = arith.addf %471, %488 : vector<1x384xf32>
    %c107 = arith.constant 107 : index
    %490 = memref.load %arg1[%c107] : memref<148xf32, #tpu.memory_space<smem>>
    %491 = vector.broadcast %490 : f32 to vector<1x384xf32>
    %492 = arith.mulf %491, %477 : vector<1x384xf32>
    %493 = arith.addf %475, %492 : vector<1x384xf32>
    %c0_81 = arith.constant 0 : index
    %c3_82 = arith.constant 3 : index
    %c36_83 = arith.constant 36 : index
    %494 = vector.load %arg2[%c0_81, %c3_82, %c36_83] : memref<1x4x512xf32, #tpu.memory_space<vmem>>, vector<1x1x384xf32>
    %495 = vector.shape_cast %494 : vector<1x1x384xf32> to vector<1x384xf32>
    %c108 = arith.constant 108 : index
    %496 = memref.load %arg1[%c108] : memref<148xf32, #tpu.memory_space<smem>>
    %497 = vector.broadcast %496 : f32 to vector<1x384xf32>
    %498 = arith.mulf %497, %495 : vector<1x384xf32>
    %499 = arith.addf %481, %498 : vector<1x384xf32>
    %c109 = arith.constant 109 : index
    %500 = memref.load %arg1[%c109] : memref<148xf32, #tpu.memory_space<smem>>
    %501 = vector.broadcast %500 : f32 to vector<1x384xf32>
    %502 = arith.mulf %501, %495 : vector<1x384xf32>
    %503 = arith.addf %485, %502 : vector<1x384xf32>
    %c110 = arith.constant 110 : index
    %504 = memref.load %arg1[%c110] : memref<148xf32, #tpu.memory_space<smem>>
    %505 = vector.broadcast %504 : f32 to vector<1x384xf32>
    %506 = arith.mulf %505, %495 : vector<1x384xf32>
    %507 = arith.addf %489, %506 : vector<1x384xf32>
    %c111 = arith.constant 111 : index
    %508 = memref.load %arg1[%c111] : memref<148xf32, #tpu.memory_space<smem>>
    %509 = vector.broadcast %508 : f32 to vector<1x384xf32>
    %510 = arith.mulf %509, %495 : vector<1x384xf32>
    %511 = arith.addf %493, %510 : vector<1x384xf32>
    %c0_84 = arith.constant 0 : index
    %c0_85 = arith.constant 0 : index
    %c37_86 = arith.constant 37 : index
    %512 = vector.load %arg2[%c0_84, %c0_85, %c37_86] : memref<1x4x512xf32, #tpu.memory_space<vmem>>, vector<1x1x384xf32>
    %513 = vector.shape_cast %512 : vector<1x1x384xf32> to vector<1x384xf32>
    %c112 = arith.constant 112 : index
    %514 = memref.load %arg1[%c112] : memref<148xf32, #tpu.memory_space<smem>>
    %515 = vector.broadcast %514 : f32 to vector<1x384xf32>
    %516 = arith.mulf %515, %513 : vector<1x384xf32>
    %517 = arith.addf %499, %516 : vector<1x384xf32>
    %c113 = arith.constant 113 : index
    %518 = memref.load %arg1[%c113] : memref<148xf32, #tpu.memory_space<smem>>
    %519 = vector.broadcast %518 : f32 to vector<1x384xf32>
    %520 = arith.mulf %519, %513 : vector<1x384xf32>
    %521 = arith.addf %503, %520 : vector<1x384xf32>
    %c114 = arith.constant 114 : index
    %522 = memref.load %arg1[%c114] : memref<148xf32, #tpu.memory_space<smem>>
    %523 = vector.broadcast %522 : f32 to vector<1x384xf32>
    %524 = arith.mulf %523, %513 : vector<1x384xf32>
    %525 = arith.addf %507, %524 : vector<1x384xf32>
    %c115 = arith.constant 115 : index
    %526 = memref.load %arg1[%c115] : memref<148xf32, #tpu.memory_space<smem>>
    %527 = vector.broadcast %526 : f32 to vector<1x384xf32>
    %528 = arith.mulf %527, %513 : vector<1x384xf32>
    %529 = arith.addf %511, %528 : vector<1x384xf32>
    %c0_87 = arith.constant 0 : index
    %c1_88 = arith.constant 1 : index
    %c37_89 = arith.constant 37 : index
    %530 = vector.load %arg2[%c0_87, %c1_88, %c37_89] : memref<1x4x512xf32, #tpu.memory_space<vmem>>, vector<1x1x384xf32>
    %531 = vector.shape_cast %530 : vector<1x1x384xf32> to vector<1x384xf32>
    %c116 = arith.constant 116 : index
    %532 = memref.load %arg1[%c116] : memref<148xf32, #tpu.memory_space<smem>>
    %533 = vector.broadcast %532 : f32 to vector<1x384xf32>
    %534 = arith.mulf %533, %531 : vector<1x384xf32>
    %535 = arith.addf %517, %534 : vector<1x384xf32>
    %c117 = arith.constant 117 : index
    %536 = memref.load %arg1[%c117] : memref<148xf32, #tpu.memory_space<smem>>
    %537 = vector.broadcast %536 : f32 to vector<1x384xf32>
    %538 = arith.mulf %537, %531 : vector<1x384xf32>
    %539 = arith.addf %521, %538 : vector<1x384xf32>
    %c118 = arith.constant 118 : index
    %540 = memref.load %arg1[%c118] : memref<148xf32, #tpu.memory_space<smem>>
    %541 = vector.broadcast %540 : f32 to vector<1x384xf32>
    %542 = arith.mulf %541, %531 : vector<1x384xf32>
    %543 = arith.addf %525, %542 : vector<1x384xf32>
    %c119 = arith.constant 119 : index
    %544 = memref.load %arg1[%c119] : memref<148xf32, #tpu.memory_space<smem>>
    %545 = vector.broadcast %544 : f32 to vector<1x384xf32>
    %546 = arith.mulf %545, %531 : vector<1x384xf32>
    %547 = arith.addf %529, %546 : vector<1x384xf32>
    %c0_90 = arith.constant 0 : index
    %c2_91 = arith.constant 2 : index
    %c37_92 = arith.constant 37 : index
    %548 = vector.load %arg2[%c0_90, %c2_91, %c37_92] : memref<1x4x512xf32, #tpu.memory_space<vmem>>, vector<1x1x384xf32>
    %549 = vector.shape_cast %548 : vector<1x1x384xf32> to vector<1x384xf32>
    %c120 = arith.constant 120 : index
    %550 = memref.load %arg1[%c120] : memref<148xf32, #tpu.memory_space<smem>>
    %551 = vector.broadcast %550 : f32 to vector<1x384xf32>
    %552 = arith.mulf %551, %549 : vector<1x384xf32>
    %553 = arith.addf %535, %552 : vector<1x384xf32>
    %c121 = arith.constant 121 : index
    %554 = memref.load %arg1[%c121] : memref<148xf32, #tpu.memory_space<smem>>
    %555 = vector.broadcast %554 : f32 to vector<1x384xf32>
    %556 = arith.mulf %555, %549 : vector<1x384xf32>
    %557 = arith.addf %539, %556 : vector<1x384xf32>
    %c122 = arith.constant 122 : index
    %558 = memref.load %arg1[%c122] : memref<148xf32, #tpu.memory_space<smem>>
    %559 = vector.broadcast %558 : f32 to vector<1x384xf32>
    %560 = arith.mulf %559, %549 : vector<1x384xf32>
    %561 = arith.addf %543, %560 : vector<1x384xf32>
    %c123 = arith.constant 123 : index
    %562 = memref.load %arg1[%c123] : memref<148xf32, #tpu.memory_space<smem>>
    %563 = vector.broadcast %562 : f32 to vector<1x384xf32>
    %564 = arith.mulf %563, %549 : vector<1x384xf32>
    %565 = arith.addf %547, %564 : vector<1x384xf32>
    %c0_93 = arith.constant 0 : index
    %c3_94 = arith.constant 3 : index
    %c37_95 = arith.constant 37 : index
    %566 = vector.load %arg2[%c0_93, %c3_94, %c37_95] : memref<1x4x512xf32, #tpu.memory_space<vmem>>, vector<1x1x384xf32>
    %567 = vector.shape_cast %566 : vector<1x1x384xf32> to vector<1x384xf32>
    %c124 = arith.constant 124 : index
    %568 = memref.load %arg1[%c124] : memref<148xf32, #tpu.memory_space<smem>>
    %569 = vector.broadcast %568 : f32 to vector<1x384xf32>
    %570 = arith.mulf %569, %567 : vector<1x384xf32>
    %571 = arith.addf %553, %570 : vector<1x384xf32>
    %c125 = arith.constant 125 : index
    %572 = memref.load %arg1[%c125] : memref<148xf32, #tpu.memory_space<smem>>
    %573 = vector.broadcast %572 : f32 to vector<1x384xf32>
    %574 = arith.mulf %573, %567 : vector<1x384xf32>
    %575 = arith.addf %557, %574 : vector<1x384xf32>
    %c126 = arith.constant 126 : index
    %576 = memref.load %arg1[%c126] : memref<148xf32, #tpu.memory_space<smem>>
    %577 = vector.broadcast %576 : f32 to vector<1x384xf32>
    %578 = arith.mulf %577, %567 : vector<1x384xf32>
    %579 = arith.addf %561, %578 : vector<1x384xf32>
    %c127 = arith.constant 127 : index
    %580 = memref.load %arg1[%c127] : memref<148xf32, #tpu.memory_space<smem>>
    %581 = vector.broadcast %580 : f32 to vector<1x384xf32>
    %582 = arith.mulf %581, %567 : vector<1x384xf32>
    %583 = arith.addf %565, %582 : vector<1x384xf32>
    %c0_96 = arith.constant 0 : index
    %c0_97 = arith.constant 0 : index
    %c38_98 = arith.constant 38 : index
    %584 = vector.load %arg2[%c0_96, %c0_97, %c38_98] : memref<1x4x512xf32, #tpu.memory_space<vmem>>, vector<1x1x384xf32>
    %585 = vector.shape_cast %584 : vector<1x1x384xf32> to vector<1x384xf32>
    %c128 = arith.constant 128 : index
    %586 = memref.load %arg1[%c128] : memref<148xf32, #tpu.memory_space<smem>>
    %587 = vector.broadcast %586 : f32 to vector<1x384xf32>
    %588 = arith.mulf %587, %585 : vector<1x384xf32>
    %589 = arith.addf %571, %588 : vector<1x384xf32>
    %c129 = arith.constant 129 : index
    %590 = memref.load %arg1[%c129] : memref<148xf32, #tpu.memory_space<smem>>
    %591 = vector.broadcast %590 : f32 to vector<1x384xf32>
    %592 = arith.mulf %591, %585 : vector<1x384xf32>
    %593 = arith.addf %575, %592 : vector<1x384xf32>
    %c130 = arith.constant 130 : index
    %594 = memref.load %arg1[%c130] : memref<148xf32, #tpu.memory_space<smem>>
    %595 = vector.broadcast %594 : f32 to vector<1x384xf32>
    %596 = arith.mulf %595, %585 : vector<1x384xf32>
    %597 = arith.addf %579, %596 : vector<1x384xf32>
    %c131 = arith.constant 131 : index
    %598 = memref.load %arg1[%c131] : memref<148xf32, #tpu.memory_space<smem>>
    %599 = vector.broadcast %598 : f32 to vector<1x384xf32>
    %600 = arith.mulf %599, %585 : vector<1x384xf32>
    %601 = arith.addf %583, %600 : vector<1x384xf32>
    %c0_99 = arith.constant 0 : index
    %c1_100 = arith.constant 1 : index
    %c38_101 = arith.constant 38 : index
    %602 = vector.load %arg2[%c0_99, %c1_100, %c38_101] : memref<1x4x512xf32, #tpu.memory_space<vmem>>, vector<1x1x384xf32>
    %603 = vector.shape_cast %602 : vector<1x1x384xf32> to vector<1x384xf32>
    %c132 = arith.constant 132 : index
    %604 = memref.load %arg1[%c132] : memref<148xf32, #tpu.memory_space<smem>>
    %605 = vector.broadcast %604 : f32 to vector<1x384xf32>
    %606 = arith.mulf %605, %603 : vector<1x384xf32>
    %607 = arith.addf %589, %606 : vector<1x384xf32>
    %c133 = arith.constant 133 : index
    %608 = memref.load %arg1[%c133] : memref<148xf32, #tpu.memory_space<smem>>
    %609 = vector.broadcast %608 : f32 to vector<1x384xf32>
    %610 = arith.mulf %609, %603 : vector<1x384xf32>
    %611 = arith.addf %593, %610 : vector<1x384xf32>
    %c134 = arith.constant 134 : index
    %612 = memref.load %arg1[%c134] : memref<148xf32, #tpu.memory_space<smem>>
    %613 = vector.broadcast %612 : f32 to vector<1x384xf32>
    %614 = arith.mulf %613, %603 : vector<1x384xf32>
    %615 = arith.addf %597, %614 : vector<1x384xf32>
    %c135 = arith.constant 135 : index
    %616 = memref.load %arg1[%c135] : memref<148xf32, #tpu.memory_space<smem>>
    %617 = vector.broadcast %616 : f32 to vector<1x384xf32>
    %618 = arith.mulf %617, %603 : vector<1x384xf32>
    %619 = arith.addf %601, %618 : vector<1x384xf32>
    %c0_102 = arith.constant 0 : index
    %c2_103 = arith.constant 2 : index
    %c38_104 = arith.constant 38 : index
    %620 = vector.load %arg2[%c0_102, %c2_103, %c38_104] : memref<1x4x512xf32, #tpu.memory_space<vmem>>, vector<1x1x384xf32>
    %621 = vector.shape_cast %620 : vector<1x1x384xf32> to vector<1x384xf32>
    %c136 = arith.constant 136 : index
    %622 = memref.load %arg1[%c136] : memref<148xf32, #tpu.memory_space<smem>>
    %623 = vector.broadcast %622 : f32 to vector<1x384xf32>
    %624 = arith.mulf %623, %621 : vector<1x384xf32>
    %625 = arith.addf %607, %624 : vector<1x384xf32>
    %c137 = arith.constant 137 : index
    %626 = memref.load %arg1[%c137] : memref<148xf32, #tpu.memory_space<smem>>
    %627 = vector.broadcast %626 : f32 to vector<1x384xf32>
    %628 = arith.mulf %627, %621 : vector<1x384xf32>
    %629 = arith.addf %611, %628 : vector<1x384xf32>
    %c138 = arith.constant 138 : index
    %630 = memref.load %arg1[%c138] : memref<148xf32, #tpu.memory_space<smem>>
    %631 = vector.broadcast %630 : f32 to vector<1x384xf32>
    %632 = arith.mulf %631, %621 : vector<1x384xf32>
    %633 = arith.addf %615, %632 : vector<1x384xf32>
    %c139 = arith.constant 139 : index
    %634 = memref.load %arg1[%c139] : memref<148xf32, #tpu.memory_space<smem>>
    %635 = vector.broadcast %634 : f32 to vector<1x384xf32>
    %636 = arith.mulf %635, %621 : vector<1x384xf32>
    %637 = arith.addf %619, %636 : vector<1x384xf32>
    %c0_105 = arith.constant 0 : index
    %c3_106 = arith.constant 3 : index
    %c38_107 = arith.constant 38 : index
    %638 = vector.load %arg2[%c0_105, %c3_106, %c38_107] : memref<1x4x512xf32, #tpu.memory_space<vmem>>, vector<1x1x384xf32>
    %639 = vector.shape_cast %638 : vector<1x1x384xf32> to vector<1x384xf32>
    %c140 = arith.constant 140 : index
    %640 = memref.load %arg1[%c140] : memref<148xf32, #tpu.memory_space<smem>>
    %641 = vector.broadcast %640 : f32 to vector<1x384xf32>
    %642 = arith.mulf %641, %639 : vector<1x384xf32>
    %643 = arith.addf %625, %642 : vector<1x384xf32>
    %c141 = arith.constant 141 : index
    %644 = memref.load %arg1[%c141] : memref<148xf32, #tpu.memory_space<smem>>
    %645 = vector.broadcast %644 : f32 to vector<1x384xf32>
    %646 = arith.mulf %645, %639 : vector<1x384xf32>
    %647 = arith.addf %629, %646 : vector<1x384xf32>
    %c142 = arith.constant 142 : index
    %648 = memref.load %arg1[%c142] : memref<148xf32, #tpu.memory_space<smem>>
    %649 = vector.broadcast %648 : f32 to vector<1x384xf32>
    %650 = arith.mulf %649, %639 : vector<1x384xf32>
    %651 = arith.addf %633, %650 : vector<1x384xf32>
    %c143 = arith.constant 143 : index
    %652 = memref.load %arg1[%c143] : memref<148xf32, #tpu.memory_space<smem>>
    %653 = vector.broadcast %652 : f32 to vector<1x384xf32>
    %654 = arith.mulf %653, %639 : vector<1x384xf32>
    %655 = arith.addf %637, %654 : vector<1x384xf32>
    %656 = tpu.concatenate %643, %647, %651, %655 in 0 : vector<1x384xf32>, vector<1x384xf32>, vector<1x384xf32>, vector<1x384xf32> -> vector<4x384xf32>
    %c0_108 = arith.constant 0 : index
    %c0_109 = arith.constant 0 : index
    %c0_110 = arith.constant 0 : index
    %657 = vector.load %arg3[%c0_108, %c0_109, %c0_110] : memref<1x4x384xf32, #tpu.memory_space<vmem>>, vector<1x4x384xf32>
    %658 = vector.shape_cast %657 : vector<1x4x384xf32> to vector<4x384xf32>
    %659 = vector.shape_cast %656 : vector<4x384xf32> to vector<1x4x384xf32>
    tpu.vector_store %arg3[%c0_108, %c0_109, %c0_110], %659 {strides = array<i32>} : memref<1x4x384xf32, #tpu.memory_space<vmem>>, vector<1x4x384xf32>,
    return
  }
  func.func @transform_0(%arg0: i32) -> i32 {
    %c0_i32 = arith.constant 0 : i32
    %c0_i32_0 = arith.constant 0 : i32
    return %c0_i32 : i32
  }
  func.func @transform_1(%arg0: i32) -> (i32, i32, i32) {
    %c0_i32 = arith.constant 0 : i32
    %c0_i32_0 = arith.constant 0 : i32
    %c0_i32_1 = arith.constant 0 : i32
    return %arg0, %c0_i32, %c0_i32_0 : i32, i32, i32
  }
  func.func @transform_2(%arg0: i32) -> (i32, i32, i32) {
    %c0_i32 = arith.constant 0 : i32
    %c0_i32_0 = arith.constant 0 : i32
    %c0_i32_1 = arith.constant 0 : i32
    return %arg0, %c0_i32, %c0_i32_0 : i32, i32, i32
  }
}

</mosaic_0001>

<llo_original>
// kernel: tpu_custom_call.1
$region0: #{tpu_custom_call.1}
  #allocation0 [shape = 'u32[]', space=smem, size = 0x4, offset = 0x4, fixed_abs, tag = 'smem constant byte address 0x4 - core index']
  #allocation1 [shape = 'u32[72,128]{1,0:T(1,128)}', space=vmem, size = 0x9000, scoped, tag = 'internal scratch']
  %s0 = inlined_call_operand.hbm [shape: f32[148], index: 0, kind: input, shape index: {}]
  %s1 = inlined_call_operand.hbm [shape: f32[2,4,512], index: 1, kind: input, shape index: {}]
  %s2 = inlined_call_operand.hbm [shape: f32[2,4,384], index: 2, kind: output, shape index: {}]
  %s3 = sld [smem:[#allocation0]]
  $region49: #{tpu_custom_call.1} parent=0
    _
  %s5 = ssub.s32 1, %s3
  %s6 = scalar_select 0, %s5, %s3
  $region1: #{tpu_custom_call.1} parent=0
    #allocation2 [shape = 'u8[1024]{0}', space=smem, size = 0x400, scoped, tag = 'input window, operand 0, single buffered']
    #allocation3 [shape = 's32[2]{0}', space=sflag, size = 0x8, scoped, tag = 'scoped memory for tpu_custom_call.1']
    #allocation4 [shape = 's32[2]{0}', space=sflag, size = 0x8, scoped, tag = 'scoped memory for tpu_custom_call.1']
    #allocation5 [shape = 's32[2]{0}', space=sflag, size = 0x8, scoped, tag = 'scoped memory for tpu_custom_call.1']
    #allocation6 [shape = 'u8[16384]{0}', space=vmem, size = 0x4000, scoped, tag = 'input window, operand 1']
    #allocation7 [shape = 'u8[12288]{0}', space=vmem, size = 0x3000, scoped, tag = 'output window, operand 0']
    %7 = vsyncpa [#allocation5], 0
    %8 = vsyncpa [#allocation3], 0
    %s9 = scalar_lea.sflag [#allocation3], 1
    %10 = vsyncpa %s9, 0
    %11 = vsyncpa [#allocation4], 0
    %s12 = scalar_lea.sflag [#allocation4], 1
    %13 = vsyncpa %s12, 0
    loop: start=0, step=1, limit=4
    $region2: #{tpu_custom_call.1} parent=1 // loop_pre_header
      _
    $region3: #{tpu_custom_call.1} parent=1 // loop_header
      %s15 = sphi 0, %s19
      %p16 = scmp.ge.s32.totalorder %s15, 4
      %s23 = sphi 0, %s23
      %s25 = sphi 0, %s23
      %s26 = sphi 0, %s25
      %s40 = sphi 0, %s26
      %s46 = sphi 0, %s48
      %s49 = sphi 0, %s46
      %s50 = sphi 0, %s49
      %s66 = sphi 0, %s50
      %s72 = sphi 0, %s74
      %s75 = sphi 0, %s72
      %s76 = sphi 0, %s75
      %s92 = sphi 0, %s76
    $region4: #{tpu_custom_call.1} parent=1 // loop_header_branch
      %18 = sbr.rel (%p16) target = $region8
    $region5: #{tpu_custom_call.1} parent=1 // loop_body
      %s20 = ssub.s32 %s15, 1
      %s21 = ssub.s32 %s15, 2
      %s22 = sadd.s32 %s15, 1
      %s24 = sadd.s32 %s23, 1
      %p27 = scmp.eq.s32.totalorder %s15, 1
      %p28 = scmp.ne.s32.totalorder %s23, %s25
      %p29 = scmp.eq.s32.totalorder %s15, 0
      %p30 = por %p28, %p29
      %p31 = scmp.ne.s32.totalorder %s23, %s25
      %p32 = scmp.eq.s32.totalorder %s20, 1
      %p33 = por %p31, %p32
      %p34 = scmp.ne.s32.totalorder %s25, %s26
      %p35 = scmp.eq.s32.totalorder %s20, 0
      %p36 = por %p34, %p35
      %p37 = scmp.ne.s32.totalorder %s25, %s26
      %p38 = scmp.eq.s32.totalorder %s21, 1
      %p39 = por %p37, %p38
      %p41 = scmp.ne.s32.totalorder %s26, %s40
      %p42 = scmp.eq.s32.totalorder %s21, 0
      %p43 = por %p41, %p42
      %s44 = ssub.s32 %s15, %s22
      %p45 = scmp.eq.s32.totalorder %s44, 0
      %s47 = sadd.s32 %s46, 1
      %s48 = scalar_select %p45, %s46, %s47
      %p51 = pneg %p45
      %p52 = scmp.eq.s32.totalorder %s15, 1
      %p53 = por %p51, %p52
      %p54 = scmp.ne.s32.totalorder %s46, %s49
      %p55 = scmp.eq.s32.totalorder %s15, 0
      %p56 = por %p54, %p55
      %p57 = scmp.ne.s32.totalorder %s46, %s49
      %p58 = scmp.eq.s32.totalorder %s20, 1
      %p59 = por %p57, %p58
      %p60 = scmp.ne.s32.totalorder %s49, %s50
      %p61 = scmp.eq.s32.totalorder %s20, 0
      %p62 = por %p60, %p61
      %p63 = scmp.ne.s32.totalorder %s49, %s50
      %p64 = scmp.eq.s32.totalorder %s21, 1
      %p65 = por %p63, %p64
      %p67 = scmp.ne.s32.totalorder %s50, %s66
      %p68 = scmp.eq.s32.totalorder %s21, 0
      %p69 = por %p67, %p68
      %s70 = ssub.s32 %s15, %s22
      %p71 = scmp.eq.s32.totalorder %s70, 0
      %s73 = sadd.s32 %s72, 1
      %s74 = scalar_select %p71, %s72, %s73
      %p77 = pneg %p71
      %p78 = scmp.eq.s32.totalorder %s15, 1
      %p79 = por %p77, %p78
      %p80 = scmp.ne.s32.totalorder %s72, %s75
      %p81 = scmp.eq.s32.totalorder %s15, 0
      %p82 = por %p80, %p81
      %p83 = scmp.ne.s32.totalorder %s72, %s75
      %p84 = scmp.eq.s32.totalorder %s20, 1
      %p85 = por %p83, %p84
      %p86 = scmp.ne.s32.totalorder %s75, %s76
      %p87 = scmp.eq.s32.totalorder %s20, 0
      %p88 = por %p86, %p87
      %p89 = scmp.ne.s32.totalorder %s75, %s76
      %p90 = scmp.eq.s32.totalorder %s21, 1
      %p91 = por %p89, %p90
      %p93 = scmp.ne.s32.totalorder %s76, %s92
      %p94 = scmp.eq.s32.totalorder %s21, 0
      %p95 = por %p93, %p94
      %p96 = scmp.le.s32.totalorder 1, %s15
      %p97 = scmp.lt.s32.totalorder %s15, 3
      %p98 = pnand %p96, %p97
      %p99 = pneg %p98
      // Predicated region
      $region9: #{tpu_custom_call.1} parent=5 // pred_check
        _
      $region10: #{tpu_custom_call.1} parent=5 // pred_check_branch
        %101 = sbr.rel (%p98) target = $region12
      $region11: #{tpu_custom_call.1} parent=5 // pred_region
        %s102 = ssub.s32 %s15, 1
        // Predicated region
        $region13: #{tpu_custom_call.1} parent=11 // pred_check
          %p103 = pneg %p36
        $region14: #{tpu_custom_call.1} parent=11 // pred_check_branch
          %105 = sbr.rel (%p103) target = $region16
        $region15: #{tpu_custom_call.1} parent=11 // pred_region
          %107 = vsyncadd [#allocation5], 0
          %s109 = sshll.u32 %s0, 4
          %s110 = int_to_ptr.hbm [resolvable:$true] %s109
          %112 = dma.hbm_to_smem %s110, 32, [#allocation2], [#allocation5]
        $region16: #{tpu_custom_call.1} parent=11 // pred_fallthru
          _
      $region12: #{tpu_custom_call.1} parent=5 // pred_fallthru
        _
      %p113 = scmp.lt.s32.totalorder %s15, 2
      // Predicated region
      $region17: #{tpu_custom_call.1} parent=5 // pred_check
        %p114 = pneg %p113
      $region18: #{tpu_custom_call.1} parent=5 // pred_check_branch
        %116 = sbr.rel (%p114) target = $region20
      $region19: #{tpu_custom_call.1} parent=5 // pred_region
        // Predicated region
        $region21: #{tpu_custom_call.1} parent=19 // pred_check
          %p117 = pneg %p56
        $region22: #{tpu_custom_call.1} parent=19 // pred_check_branch
          %119 = sbr.rel (%p117) target = $region24
        $region23: #{tpu_custom_call.1} parent=19 // pred_region
          %s120 = sand.u32 %s46, 1
          %s121 = scalar_lea.sflag [#allocation3], %s120
          %s122 = sand.u32 %s46, 1
          %s123 = smul.addr %s122, 16
          %s124 = scalar_lea.vmem [#allocation6], %s123
          %126 = vsyncadd %s121, 0
          %s127 = smul.addr %s15, 4
          %s128 = smul.addr %s127, 4
          %s129 = scalar_lea.hbm %s1, %s128
          %s131 = sshll.u32 %s129, 4
          %s132 = int_to_ptr.hbm [resolvable:$true] %s131
          %s133 = sshll.u32 %s124, 4
          %s134 = int_to_ptr.vmem [resolvable:$true] %s133
          %136 = dma.hbm_to_vmem [thread:$0]  %s132, 256, %s134, %s121
        $region24: #{tpu_custom_call.1} parent=19 // pred_fallthru
          _
      $region20: #{tpu_custom_call.1} parent=5 // pred_fallthru
        _
      %p137 = scmp.le.s32.totalorder 1, %s15
      %p138 = scmp.lt.s32.totalorder %s15, 3
      %p139 = pnand %p137, %p138
      %p140 = pneg %p139
      // Predicated region
      $region25: #{tpu_custom_call.1} parent=5 // pred_check
        _
      $region26: #{tpu_custom_call.1} parent=5 // pred_check_branch
        %142 = sbr.rel (%p139) target = $region28
      $region27: #{tpu_custom_call.1} parent=5 // pred_region
        %s143 = ssub.s32 %s15, 1
        // Predicated region
        $region29: #{tpu_custom_call.1} parent=27 // pred_check
          %p144 = pneg %p36
        $region30: #{tpu_custom_call.1} parent=27 // pred_check_branch
          %146 = sbr.rel (%p144) target = $region32
        $region31: #{tpu_custom_call.1} parent=27 // pred_region
          %148 = dma.done [#allocation5], 32
        $region32: #{tpu_custom_call.1} parent=27 // pred_fallthru
          _
        %s149 = sand.u32 %s49, 1
        %s150 = scalar_lea.sflag [#allocation3], %s149
        %s151 = sand.u32 %s49, 1
        %s152 = smul.addr %s151, 16
        %s153 = scalar_lea.vmem [#allocation6], %s152
        // Predicated region
        $region33: #{tpu_custom_call.1} parent=27 // pred_check
          %p154 = pneg %p62
        $region34: #{tpu_custom_call.1} parent=27 // pred_check_branch
          %156 = sbr.rel (%p154) target = $region36
        $region35: #{tpu_custom_call.1} parent=27 // pred_region
          %158 = dma.done %s150, 256
        $region36: #{tpu_custom_call.1} parent=27 // pred_fallthru
          _
        %159 = sfence
        %p160 = pneg %p36
        %p161 = pneg %p33
        %s162 = sand.u32 %s49, 1
        %s163 = scalar_lea.sflag [#allocation3], %s162
        %s164 = sand.u32 %s49, 1
        %s165 = smul.addr %s164, 16
        %s166 = scalar_lea.vmem [#allocation6], %s165
        %p167 = pneg %p62
        %p168 = pneg %p59
        %p169 = pneg %p88
        %p170 = pneg %p85
        %s171 = sand.u32 %s75, 1
        %s172 = scalar_lea.sflag [#allocation4], %s171
        %s173 = sand.u32 %s75, 1
        %s174 = smul.addr %s173, 12
        %s175 = scalar_lea.vmem [#allocation7], %s174
        %s176 = sld [smem:[#allocation2 + $0x90]]
        %v177 = vstv %s176
        %s178 = sld [smem:[#allocation2 + $0x91]]
        %v179 = vstv %s178
        %s180 = sld [smem:[#allocation2 + $0x92]]
        %v181 = vstv %s180
        %s182 = sld [smem:[#allocation2 + $0x93]]
        %v183 = vstv %s182
        %v184 = vld [vmem:[%s153] ss:$4 sm:$0x7]
        %s185 = sld [smem:[#allocation2]]
        %v186 = vstv %s185
        %v187 = vmul.f32 %v186, %v184
        %v188 = vadd.f32 %v177, %v187
        %s189 = sld [smem:[#allocation2 + $0x1]]
        %v190 = vstv %s189
        %v191 = vmul.f32 %v190, %v184
        %v192 = vadd.f32 %v179, %v191
        %s193 = sld [smem:[#allocation2 + $0x2]]
        %v194 = vstv %s193
        %v195 = vmul.f32 %v194, %v184
        %v196 = vadd.f32 %v181, %v195
        %s197 = sld [smem:[#allocation2 + $0x3]]
        %v198 = vstv %s197
        %v199 = vmul.f32 %v198, %v184
        %v200 = vadd.f32 %v183, %v199
        %s201 = scalar_lea.vmem %s153, 1 [#allocation6]
        %v202 = vld [vmem:[%s201] ss:$4 sm:$0x7]
        %s203 = sld [smem:[#allocation2 + $0x4]]
        %v204 = vstv %s203
        %v205 = vmul.f32 %v204, %v202
        %v206 = vadd.f32 %v188, %v205
        %s207 = sld [smem:[#allocation2 + $0x5]]
        %v208 = vstv %s207
        %v209 = vmul.f32 %v208, %v202
        %v210 = vadd.f32 %v192, %v209
        %s211 = sld [smem:[#allocation2 + $0x6]]
        %v212 = vstv %s211
        %v213 = vmul.f32 %v212, %v202
        %v214 = vadd.f32 %v196, %v213
        %s215 = sld [smem:[#allocation2 + $0x7]]
        %v216 = vstv %s215
        %v217 = vmul.f32 %v216, %v202
        %v218 = vadd.f32 %v200, %v217
        %s219 = scalar_lea.vmem %s153, 2 [#allocation6]
        %v220 = vld [vmem:[%s219] ss:$4 sm:$0x7]
        %s221 = sld [smem:[#allocation2 + $0x8]]
        %v222 = vstv %s221
        %v223 = vmul.f32 %v222, %v220
        %v224 = vadd.f32 %v206, %v223
        %s225 = sld [smem:[#allocation2 + $0x9]]
        %v226 = vstv %s225
        %v227 = vmul.f32 %v226, %v220
        %v228 = vadd.f32 %v210, %v227
        %s229 = sld [smem:[#allocation2 + $0xa]]
        %v230 = vstv %s229
        %v231 = vmul.f32 %v230, %v220
        %v232 = vadd.f32 %v214, %v231
        %s233 = sld [smem:[#allocation2 + $0xb]]
        %v234 = vstv %s233
        %v235 = vmul.f32 %v234, %v220
        %v236 = vadd.f32 %v218, %v235
        %s237 = scalar_lea.vmem %s153, 3 [#allocation6]
        %v238 = vld [vmem:[%s237] ss:$4 sm:$0x7]
        %s239 = sld [smem:[#allocation2 + $0xc]]
        %v240 = vstv %s239
        %v241 = vmul.f32 %v240, %v238
        %v242 = vadd.f32 %v224, %v241
        %s243 = sld [smem:[#allocation2 + $0xd]]
        %v244 = vstv %s243
        %v245 = vmul.f32 %v244, %v238
        %v246 = vadd.f32 %v228, %v245
        %s247 = sld [smem:[#allocation2 + $0xe]]
        %v248 = vstv %s247
        %v249 = vmul.f32 %v248, %v238
        %v250 = vadd.f32 %v232, %v249
        %s251 = sld [smem:[#allocation2 + $0xf]]
        %v252 = vstv %s251
        %v253 = vmul.f32 %v252, %v238
        %v254 = vadd.f32 %v236, %v253
        %v255 = vld [vmem:[%s153] ss:$4 sm:$0xf]
        %s256 = sld [smem:[#allocation2 + $0x10]]
        %v257 = vstv %s256
        %v258 = vmul.f32 %v257, %v255
        %260 = vrot.lane.b32.xlu0 %v258, 127
        %v261 = vpop.permute.xlu0 %260
        %v262 = vrot.slane %v261, 1
        %vm263 = vcmask 1039360
        %v264 = vsel %vm263, %v261, %v262
        %v266 = vadd.f32 %v242, %v264
        %s267 = sld [smem:[#allocation2 + $0x11]]
        %v268 = vstv %s267
        %v269 = vmul.f32 %v268, %v255
        %271 = vrot.lane.b32.xlu0 %v269, 127
        %v272 = vpop.permute.xlu0 %271
        %v273 = vrot.slane %v272, 1
        %v274 = vsel %vm263, %v272, %v273
        %v276 = vadd.f32 %v246, %v274
        %s277 = sld [smem:[#allocation2 + $0x12]]
        %v278 = vstv %s277
        %v279 = vmul.f32 %v278, %v255
        %281 = vrot.lane.b32.xlu0 %v279, 127
        %v282 = vpop.permute.xlu0 %281
        %v283 = vrot.slane %v282, 1
        %v284 = vsel %vm263, %v282, %v283
        %v286 = vadd.f32 %v250, %v284
        %s287 = sld [smem:[#allocation2 + $0x13]]
        %v288 = vstv %s287
        %v289 = vmul.f32 %v288, %v255
        %291 = vrot.lane.b32.xlu0 %v289, 127
        %v292 = vpop.permute.xlu0 %291
        %v293 = vrot.slane %v292, 1
        %v294 = vsel %vm263, %v292, %v293
        %v296 = vadd.f32 %v254, %v294
        %s297 = scalar_lea.vmem %s153, 1 [#allocation6]
        %v298 = vld [vmem:[%s297] ss:$4 sm:$0xf]
        %s299 = sld [smem:[#allocation2 + $0x14]]
        %v300 = vstv %s299
        %v301 = vmul.f32 %v300, %v298
        %303 = vrot.lane.b32.xlu0 %v301, 127
        %v304 = vpop.permute.xlu0 %303
        %v305 = vrot.slane %v304, 1
        %v306 = vsel %vm263, %v304, %v305
        %v308 = vadd.f32 %v266, %v306
        %s309 = sld [smem:[#allocation2 + $0x15]]
        %v310 = vstv %s309
        %v311 = vmul.f32 %v310, %v298
        %313 = vrot.lane.b32.xlu0 %v311, 127
        %v314 = vpop.permute.xlu0 %313
        %v315 = vrot.slane %v314, 1
        %v316 = vsel %vm263, %v314, %v315
        %v318 = vadd.f32 %v276, %v316
        %s319 = sld [smem:[#allocation2 + $0x16]]
        %v320 = vstv %s319
        %v321 = vmul.f32 %v320, %v298
        %323 = vrot.lane.b32.xlu0 %v321, 127
        %v324 = vpop.permute.xlu0 %323
        %v325 = vrot.slane %v324, 1
        %v326 = vsel %vm263, %v324, %v325
        %v328 = vadd.f32 %v286, %v326
        %s329 = sld [smem:[#allocation2 + $0x17]]
        %v330 = vstv %s329
        %v331 = vmul.f32 %v330, %v298
        %333 = vrot.lane.b32.xlu0 %v331, 127
        %v334 = vpop.permute.xlu0 %333
        %v335 = vrot.slane %v334, 1
        %v336 = vsel %vm263, %v334, %v335
        %v338 = vadd.f32 %v296, %v336
        %s339 = scalar_lea.vmem %s153, 2 [#allocation6]
        %v340 = vld [vmem:[%s339] ss:$4 sm:$0xf]
        %s341 = sld [smem:[#allocation2 + $0x18]]
        %v342 = vstv %s341
        %v343 = vmul.f32 %v342, %v340
        %345 = vrot.lane.b32.xlu0 %v343, 127
        %v346 = vpop.permute.xlu0 %345
        %v347 = vrot.slane %v346, 1
        %v348 = vsel %vm263, %v346, %v347
        %v350 = vadd.f32 %v308, %v348
        %s351 = sld [smem:[#allocation2 + $0x19]]
        %v352 = vstv %s351
        %v353 = vmul.f32 %v352, %v340
        %355 = vrot.lane.b32.xlu0 %v353, 127
        %v356 = vpop.permute.xlu0 %355
        %v357 = vrot.slane %v356, 1
        %v358 = vsel %vm263, %v356, %v357
        %v360 = vadd.f32 %v318, %v358
        %s361 = sld [smem:[#allocation2 + $0x1a]]
        %v362 = vstv %s361
        %v363 = vmul.f32 %v362, %v340
        %365 = vrot.lane.b32.xlu0 %v363, 127
        %v366 = vpop.permute.xlu0 %365
        %v367 = vrot.slane %v366, 1
        %v368 = vsel %vm263, %v366, %v367
        %v370 = vadd.f32 %v328, %v368
        %s371 = sld [smem:[#allocation2 + $0x1b]]
        %v372 = vstv %s371
        %v373 = vmul.f32 %v372, %v340
        %375 = vrot.lane.b32.xlu0 %v373, 127
        %v376 = vpop.permute.xlu0 %375
        %v377 = vrot.slane %v376, 1
        %v378 = vsel %vm263, %v376, %v377
        %v380 = vadd.f32 %v338, %v378
        %s381 = scalar_lea.vmem %s153, 3 [#allocation6]
        %v382 = vld [vmem:[%s381] ss:$4 sm:$0xf]
        %s383 = sld [smem:[#allocation2 + $0x1c]]
        %v384 = vstv %s383
        %v385 = vmul.f32 %v384, %v382
        %387 = vrot.lane.b32.xlu0 %v385, 127
        %v388 = vpop.permute.xlu0 %387
        %v389 = vrot.slane %v388, 1
        %v390 = vsel %vm263, %v388, %v389
        %v392 = vadd.f32 %v350, %v390
        %s393 = sld [smem:[#allocation2 + $0x1d]]
        %v394 = vstv %s393
        %v395 = vmul.f32 %v394, %v382
        %397 = vrot.lane.b32.xlu0 %v395, 127
        %v398 = vpop.permute.xlu0 %397
        %v399 = vrot.slane %v398, 1
        %v400 = vsel %vm263, %v398, %v399
        %v402 = vadd.f32 %v360, %v400
        %s403 = sld [smem:[#allocation2 + $0x1e]]
        %v404 = vstv %s403
        %v405 = vmul.f32 %v404, %v382
        %407 = vrot.lane.b32.xlu0 %v405, 127
        %v408 = vpop.permute.xlu0 %407
        %v409 = vrot.slane %v408, 1
        %v410 = vsel %vm263, %v408, %v409
        %v412 = vadd.f32 %v370, %v410
        %s413 = sld [smem:[#allocation2 + $0x1f]]
        %v414 = vstv %s413
        %v415 = vmul.f32 %v414, %v382
        %417 = vrot.lane.b32.xlu0 %v415, 127
        %v418 = vpop.permute.xlu0 %417
        %v419 = vrot.slane %v418, 1
        %v420 = vsel %vm263, %v418, %v419
        %v422 = vadd.f32 %v380, %v420
        %s423 = sld [smem:[#allocation2 + $0x20]]
        %v424 = vstv %s423
        %v425 = vmul.f32 %v424, %v255
        %427 = vrot.lane.b32.xlu0 %v425, 126
        %v428 = vpop.permute.xlu0 %427
        %v429 = vrot.slane %v428, 1
        %vm430 = vcmask 1031168
        %v431 = vsel %vm430, %v428, %v429
        %v433 = vadd.f32 %v392, %v431
        %s434 = sld [smem:[#allocation2 + $0x21]]
        %v435 = vstv %s434
        %v436 = vmul.f32 %v435, %v255
        %438 = vrot.lane.b32.xlu0 %v436, 126
        %v439 = vpop.permute.xlu0 %438
        %v440 = vrot.slane %v439, 1
        %v441 = vsel %vm430, %v439, %v440
        %v443 = vadd.f32 %v402, %v441
        %s444 = sld [smem:[#allocation2 + $0x22]]
        %v445 = vstv %s444
        %v446 = vmul.f32 %v445, %v255
        %448 = vrot.lane.b32.xlu0 %v446, 126
        %v449 = vpop.permute.xlu0 %448
        %v450 = vrot.slane %v449, 1
        %v451 = vsel %vm430, %v449, %v450
        %v453 = vadd.f32 %v412, %v451
        %s454 = sld [smem:[#allocation2 + $0x23]]
        %v455 = vstv %s454
        %v456 = vmul.f32 %v455, %v255
        %458 = vrot.lane.b32.xlu0 %v456, 126
        %v459 = vpop.permute.xlu0 %458
        %v460 = vrot.slane %v459, 1
        %v461 = vsel %vm430, %v459, %v460
        %v463 = vadd.f32 %v422, %v461
        %s464 = sld [smem:[#allocation2 + $0x24]]
        %v465 = vstv %s464
        %v466 = vmul.f32 %v465, %v298
        %468 = vrot.lane.b32.xlu0 %v466, 126
        %v469 = vpop.permute.xlu0 %468
        %v470 = vrot.slane %v469, 1
        %v471 = vsel %vm430, %v469, %v470
        %v473 = vadd.f32 %v433, %v471
        %s474 = sld [smem:[#allocation2 + $0x25]]
        %v475 = vstv %s474
        %v476 = vmul.f32 %v475, %v298
        %478 = vrot.lane.b32.xlu0 %v476, 126
        %v479 = vpop.permute.xlu0 %478
        %v480 = vrot.slane %v479, 1
        %v481 = vsel %vm430, %v479, %v480
        %v483 = vadd.f32 %v443, %v481
        %s484 = sld [smem:[#allocation2 + $0x26]]
        %v485 = vstv %s484
        %v486 = vmul.f32 %v485, %v298
        %488 = vrot.lane.b32.xlu0 %v486, 126
        %v489 = vpop.permute.xlu0 %488
        %v490 = vrot.slane %v489, 1
        %v491 = vsel %vm430, %v489, %v490
        %v493 = vadd.f32 %v453, %v491
        %s494 = sld [smem:[#allocation2 + $0x27]]
        %v495 = vstv %s494
        %v496 = vmul.f32 %v495, %v298
        %498 = vrot.lane.b32.xlu0 %v496, 126
        %v499 = vpop.permute.xlu0 %498
        %v500 = vrot.slane %v499, 1
        %v501 = vsel %vm430, %v499, %v500
        %v503 = vadd.f32 %v463, %v501
        %s504 = sld [smem:[#allocation2 + $0x28]]
        %v505 = vstv %s504
        %v506 = vmul.f32 %v505, %v340
        %508 = vrot.lane.b32.xlu0 %v506, 126
        %v509 = vpop.permute.xlu0 %508
        %v510 = vrot.slane %v509, 1
        %v511 = vsel %vm430, %v509, %v510
        %v513 = vadd.f32 %v473, %v511
        %s514 = sld [smem:[#allocation2 + $0x29]]
        %v515 = vstv %s514
        %v516 = vmul.f32 %v515, %v340
        %518 = vrot.lane.b32.xlu0 %v516, 126
        %v519 = vpop.permute.xlu0 %518
        %v520 = vrot.slane %v519, 1
        %v521 = vsel %vm430, %v519, %v520
        %v523 = vadd.f32 %v483, %v521
        %s524 = sld [smem:[#allocation2 + $0x2a]]
        %v525 = vstv %s524
        %v526 = vmul.f32 %v525, %v340
        %528 = vrot.lane.b32.xlu0 %v526, 126
        %v529 = vpop.permute.xlu0 %528
        %v530 = vrot.slane %v529, 1
        %v531 = vsel %vm430, %v529, %v530
        %v533 = vadd.f32 %v493, %v531
        %s534 = sld [smem:[#allocation2 + $0x2b]]
        %v535 = vstv %s534
        %v536 = vmul.f32 %v535, %v340
        %538 = vrot.lane.b32.xlu0 %v536, 126
        %v539 = vpop.permute.xlu0 %538
        %v540 = vrot.slane %v539, 1
        %v541 = vsel %vm430, %v539, %v540
        %v543 = vadd.f32 %v503, %v541
        %s544 = sld [smem:[#allocation2 + $0x2c]]
        %v545 = vstv %s544
        %v546 = vmul.f32 %v545, %v382
        %548 = vrot.lane.b32.xlu0 %v546, 126
        %v549 = vpop.permute.xlu0 %548
        %v550 = vrot.slane %v549, 1
        %v551 = vsel %vm430, %v549, %v550
        %v553 = vadd.f32 %v513, %v551
        %s554 = sld [smem:[#allocation2 + $0x2d]]
        %v555 = vstv %s554
        %v556 = vmul.f32 %v555, %v382
        %558 = vrot.lane.b32.xlu0 %v556, 126
        %v559 = vpop.permute.xlu0 %558
        %v560 = vrot.slane %v559, 1
        %v561 = vsel %vm430, %v559, %v560
        %v563 = vadd.f32 %v523, %v561
        %s564 = sld [smem:[#allocation2 + $0x2e]]
        %v565 = vstv %s564
        %v566 = vmul.f32 %v565, %v382
        %568 = vrot.lane.b32.xlu0 %v566, 126
        %v569 = vpop.permute.xlu0 %568
        %v570 = vrot.slane %v569, 1
        %v571 = vsel %vm430, %v569, %v570
        %v573 = vadd.f32 %v533, %v571
        %s574 = sld [smem:[#allocation2 + $0x2f]]
        %v575 = vstv %s574
        %v576 = vmul.f32 %v575, %v382
        %578 = vrot.lane.b32.xlu0 %v576, 126
        %v579 = vpop.permute.xlu0 %578
        %v580 = vrot.slane %v579, 1
        %v581 = vsel %vm430, %v579, %v580
        %v583 = vadd.f32 %v543, %v581
        %s584 = sld [smem:[#allocation2 + $0x30]]
        %v585 = vstv %s584
        %v586 = vmul.f32 %v585, %v255
        %588 = vrot.lane.b32.xlu0 %v586, 110
        %v589 = vpop.permute.xlu0 %588
        %v590 = vrot.slane %v589, 1
        %vm591 = vcmask 900096
        %v592 = vsel %vm591, %v589, %v590
        %v594 = vadd.f32 %v553, %v592
        %s595 = sld [smem:[#allocation2 + $0x31]]
        %v596 = vstv %s595
        %v597 = vmul.f32 %v596, %v255
        %599 = vrot.lane.b32.xlu0 %v597, 110
        %v600 = vpop.permute.xlu0 %599
        %v601 = vrot.slane %v600, 1
        %v602 = vsel %vm591, %v600, %v601
        %v604 = vadd.f32 %v563, %v602
        %s605 = sld [smem:[#allocation2 + $0x32]]
        %v606 = vstv %s605
        %v607 = vmul.f32 %v606, %v255
        %609 = vrot.lane.b32.xlu0 %v607, 110
        %v610 = vpop.permute.xlu0 %609
        %v611 = vrot.slane %v610, 1
        %v612 = vsel %vm591, %v610, %v611
        %v614 = vadd.f32 %v573, %v612
        %s615 = sld [smem:[#allocation2 + $0x33]]
        %v616 = vstv %s615
        %v617 = vmul.f32 %v616, %v255
        %619 = vrot.lane.b32.xlu0 %v617, 110
        %v620 = vpop.permute.xlu0 %619
        %v621 = vrot.slane %v620, 1
        %v622 = vsel %vm591, %v620, %v621
        %v624 = vadd.f32 %v583, %v622
        %s625 = sld [smem:[#allocation2 + $0x34]]
        %v626 = vstv %s625
        %v627 = vmul.f32 %v626, %v298
        %629 = vrot.lane.b32.xlu0 %v627, 110
        %v630 = vpop.permute.xlu0 %629
        %v631 = vrot.slane %v630, 1
        %v632 = vsel %vm591, %v630, %v631
        %v634 = vadd.f32 %v594, %v632
        %s635 = sld [smem:[#allocation2 + $0x35]]
        %v636 = vstv %s635
        %v637 = vmul.f32 %v636, %v298
        %639 = vrot.lane.b32.xlu0 %v637, 110
        %v640 = vpop.permute.xlu0 %639
        %v641 = vrot.slane %v640, 1
        %v642 = vsel %vm591, %v640, %v641
        %v644 = vadd.f32 %v604, %v642
        %s645 = sld [smem:[#allocation2 + $0x36]]
        %v646 = vstv %s645
        %v647 = vmul.f32 %v646, %v298
        %649 = vrot.lane.b32.xlu0 %v647, 110
        %v650 = vpop.permute.xlu0 %649
        %v651 = vrot.slane %v650, 1
        %v652 = vsel %vm591, %v650, %v651
        %v654 = vadd.f32 %v614, %v652
        %s655 = sld [smem:[#allocation2 + $0x37]]
        %v656 = vstv %s655
        %v657 = vmul.f32 %v656, %v298
        %659 = vrot.lane.b32.xlu0 %v657, 110
        %v660 = vpop.permute.xlu0 %659
        %v661 = vrot.slane %v660, 1
        %v662 = vsel %vm591, %v660, %v661
        %v664 = vadd.f32 %v624, %v662
        %s665 = sld [smem:[#allocation2 + $0x38]]
        %v666 = vstv %s665
        %v667 = vmul.f32 %v666, %v340
        %669 = vrot.lane.b32.xlu0 %v667, 110
        %v670 = vpop.permute.xlu0 %669
        %v671 = vrot.slane %v670, 1
        %v672 = vsel %vm591, %v670, %v671
        %v674 = vadd.f32 %v634, %v672
        %s675 = sld [smem:[#allocation2 + $0x39]]
        %v676 = vstv %s675
        %v677 = vmul.f32 %v676, %v340
        %679 = vrot.lane.b32.xlu0 %v677, 110
        %v680 = vpop.permute.xlu0 %679
        %v681 = vrot.slane %v680, 1
        %v682 = vsel %vm591, %v680, %v681
        %v684 = vadd.f32 %v644, %v682
        %s685 = sld [smem:[#allocation2 + $0x3a]]
        %v686 = vstv %s685
        %v687 = vmul.f32 %v686, %v340
        %689 = vrot.lane.b32.xlu0 %v687, 110
        %v690 = vpop.permute.xlu0 %689
        %v691 = vrot.slane %v690, 1
        %v692 = vsel %vm591, %v690, %v691
        %v694 = vadd.f32 %v654, %v692
        %s695 = sld [smem:[#allocation2 + $0x3b]]
        %v696 = vstv %s695
        %v697 = vmul.f32 %v696, %v340
        %699 = vrot.lane.b32.xlu0 %v697, 110
        %v700 = vpop.permute.xlu0 %699
        %v701 = vrot.slane %v700, 1
        %v702 = vsel %vm591, %v700, %v701
        %v704 = vadd.f32 %v664, %v702
        %s705 = sld [smem:[#allocation2 + $0x3c]]
        %v706 = vstv %s705
        %v707 = vmul.f32 %v706, %v382
        %709 = vrot.lane.b32.xlu0 %v707, 110
        %v710 = vpop.permute.xlu0 %709
        %v711 = vrot.slane %v710, 1
        %v712 = vsel %vm591, %v710, %v711
        %v714 = vadd.f32 %v674, %v712
        %s715 = sld [smem:[#allocation2 + $0x3d]]
        %v716 = vstv %s715
        %v717 = vmul.f32 %v716, %v382
        %719 = vrot.lane.b32.xlu0 %v717, 110
        %v720 = vpop.permute.xlu0 %719
        %v721 = vrot.slane %v720, 1
        %v722 = vsel %vm591, %v720, %v721
        %v724 = vadd.f32 %v684, %v722
        %s725 = sld [smem:[#allocation2 + $0x3e]]
        %v726 = vstv %s725
        %v727 = vmul.f32 %v726, %v382
        %729 = vrot.lane.b32.xlu0 %v727, 110
        %v730 = vpop.permute.xlu0 %729
        %v731 = vrot.slane %v730, 1
        %v732 = vsel %vm591, %v730, %v731
        %v734 = vadd.f32 %v694, %v732
        %s735 = sld [smem:[#allocation2 + $0x3f]]
        %v736 = vstv %s735
        %v737 = vmul.f32 %v736, %v382
        %739 = vrot.lane.b32.xlu0 %v737, 110
        %v740 = vpop.permute.xlu0 %739
        %v741 = vrot.slane %v740, 1
        %v742 = vsel %vm591, %v740, %v741
        %v744 = vadd.f32 %v704, %v742
        %s745 = sld [smem:[#allocation2 + $0x40]]
        %v746 = vstv %s745
        %v747 = vmul.f32 %v746, %v255
        %749 = vrot.lane.b32.xlu0 %v747, 109
        %v750 = vpop.permute.xlu0 %749
        %v751 = vrot.slane %v750, 1
        %vm752 = vcmask 891904
        %v753 = vsel %vm752, %v750, %v751
        %v755 = vadd.f32 %v714, %v753
        %s756 = sld [smem:[#allocation2 + $0x41]]
        %v757 = vstv %s756
        %v758 = vmul.f32 %v757, %v255
        %760 = vrot.lane.b32.xlu0 %v758, 109
        %v761 = vpop.permute.xlu0 %760
        %v762 = vrot.slane %v761, 1
        %v763 = vsel %vm752, %v761, %v762
        %v765 = vadd.f32 %v724, %v763
        %s766 = sld [smem:[#allocation2 + $0x42]]
        %v767 = vstv %s766
        %v768 = vmul.f32 %v767, %v255
        %770 = vrot.lane.b32.xlu0 %v768, 109
        %v771 = vpop.permute.xlu0 %770
        %v772 = vrot.slane %v771, 1
        %v773 = vsel %vm752, %v771, %v772
        %v775 = vadd.f32 %v734, %v773
        %s776 = sld [smem:[#allocation2 + $0x43]]
        %v777 = vstv %s776
        %v778 = vmul.f32 %v777, %v255
        %780 = vrot.lane.b32.xlu0 %v778, 109
        %v781 = vpop.permute.xlu0 %780
        %v782 = vrot.slane %v781, 1
        %v783 = vsel %vm752, %v781, %v782
        %v785 = vadd.f32 %v744, %v783
        %s786 = sld [smem:[#allocation2 + $0x44]]
        %v787 = vstv %s786
        %v788 = vmul.f32 %v787, %v298
        %790 = vrot.lane.b32.xlu0 %v788, 109
        %v791 = vpop.permute.xlu0 %790
        %v792 = vrot.slane %v791, 1
        %v793 = vsel %vm752, %v791, %v792
        %v795 = vadd.f32 %v755, %v793
        %s796 = sld [smem:[#allocation2 + $0x45]]
        %v797 = vstv %s796
        %v798 = vmul.f32 %v797, %v298
        %800 = vrot.lane.b32.xlu0 %v798, 109
        %v801 = vpop.permute.xlu0 %800
        %v802 = vrot.slane %v801, 1
        %v803 = vsel %vm752, %v801, %v802
        %v805 = vadd.f32 %v765, %v803
        %s806 = sld [smem:[#allocation2 + $0x46]]
        %v807 = vstv %s806
        %v808 = vmul.f32 %v807, %v298
        %810 = vrot.lane.b32.xlu0 %v808, 109
        %v811 = vpop.permute.xlu0 %810
        %v812 = vrot.slane %v811, 1
        %v813 = vsel %vm752, %v811, %v812
        %v815 = vadd.f32 %v775, %v813
        %s816 = sld [smem:[#allocation2 + $0x47]]
        %v817 = vstv %s816
        %v818 = vmul.f32 %v817, %v298
        %820 = vrot.lane.b32.xlu0 %v818, 109
        %v821 = vpop.permute.xlu0 %820
        %v822 = vrot.slane %v821, 1
        %v823 = vsel %vm752, %v821, %v822
        %v825 = vadd.f32 %v785, %v823
        %s826 = sld [smem:[#allocation2 + $0x48]]
        %v827 = vstv %s826
        %v828 = vmul.f32 %v827, %v340
        %830 = vrot.lane.b32.xlu0 %v828, 109
        %v831 = vpop.permute.xlu0 %830
        %v832 = vrot.slane %v831, 1
        %v833 = vsel %vm752, %v831, %v832
        %v835 = vadd.f32 %v795, %v833
        %s836 = sld [smem:[#allocation2 + $0x49]]
        %v837 = vstv %s836
        %v838 = vmul.f32 %v837, %v340
        %840 = vrot.lane.b32.xlu0 %v838, 109
        %v841 = vpop.permute.xlu0 %840
        %v842 = vrot.slane %v841, 1
        %v843 = vsel %vm752, %v841, %v842
        %v845 = vadd.f32 %v805, %v843
        %s846 = sld [smem:[#allocation2 + $0x4a]]
        %v847 = vstv %s846
        %v848 = vmul.f32 %v847, %v340
        %850 = vrot.lane.b32.xlu0 %v848, 109
        %v851 = vpop.permute.xlu0 %850
        %v852 = vrot.slane %v851, 1
        %v853 = vsel %vm752, %v851, %v852
        %v855 = vadd.f32 %v815, %v853
        %s856 = sld [smem:[#allocation2 + $0x4b]]
        %v857 = vstv %s856
        %v858 = vmul.f32 %v857, %v340
        %860 = vrot.lane.b32.xlu0 %v858, 109
        %v861 = vpop.permute.xlu0 %860
        %v862 = vrot.slane %v861, 1
        %v863 = vsel %vm752, %v861, %v862
        %v865 = vadd.f32 %v825, %v863
        %s866 = sld [smem:[#allocation2 + $0x4c]]
        %v867 = vstv %s866
        %v868 = vmul.f32 %v867, %v382
        %870 = vrot.lane.b32.xlu0 %v868, 109
        %v871 = vpop.permute.xlu0 %870
        %v872 = vrot.slane %v871, 1
        %v873 = vsel %vm752, %v871, %v872
        %v875 = vadd.f32 %v835, %v873
        %s876 = sld [smem:[#allocation2 + $0x4d]]
        %v877 = vstv %s876
        %v878 = vmul.f32 %v877, %v382
        %880 = vrot.lane.b32.xlu0 %v878, 109
        %v881 = vpop.permute.xlu0 %880
        %v882 = vrot.slane %v881, 1
        %v883 = vsel %vm752, %v881, %v882
        %v885 = vadd.f32 %v845, %v883
        %s886 = sld [smem:[#allocation2 + $0x4e]]
        %v887 = vstv %s886
        %v888 = vmul.f32 %v887, %v382
        %890 = vrot.lane.b32.xlu0 %v888, 109
        %v891 = vpop.permute.xlu0 %890
        %v892 = vrot.slane %v891, 1
        %v893 = vsel %vm752, %v891, %v892
        %v895 = vadd.f32 %v855, %v893
        %s896 = sld [smem:[#allocation2 + $0x4f]]
        %v897 = vstv %s896
        %v898 = vmul.f32 %v897, %v382
        %900 = vrot.lane.b32.xlu0 %v898, 109
        %v901 = vpop.permute.xlu0 %900
        %v902 = vrot.slane %v901, 1
        %v903 = vsel %vm752, %v901, %v902
        %v905 = vadd.f32 %v865, %v903
        %s906 = sld [smem:[#allocation2 + $0x50]]
        %v907 = vstv %s906
        %v908 = vmul.f32 %v907, %v255
        %910 = vrot.lane.b32.xlu0 %v908, 108
        %v911 = vpop.permute.xlu0 %910
        %v912 = vrot.slane %v911, 1
        %vm913 = vcmask 883712
        %v914 = vsel %vm913, %v911, %v912
        %v916 = vadd.f32 %v875, %v914
        %s917 = sld [smem:[#allocation2 + $0x51]]
        %v918 = vstv %s917
        %v919 = vmul.f32 %v918, %v255
        %921 = vrot.lane.b32.xlu0 %v919, 108
        %v922 = vpop.permute.xlu0 %921
        %v923 = vrot.slane %v922, 1
        %v924 = vsel %vm913, %v922, %v923
        %v926 = vadd.f32 %v885, %v924
        %s927 = sld [smem:[#allocation2 + $0x52]]
        %v928 = vstv %s927
        %v929 = vmul.f32 %v928, %v255
        %931 = vrot.lane.b32.xlu0 %v929, 108
        %v932 = vpop.permute.xlu0 %931
        %v933 = vrot.slane %v932, 1
        %v934 = vsel %vm913, %v932, %v933
        %v936 = vadd.f32 %v895, %v934
        %s937 = sld [smem:[#allocation2 + $0x53]]
        %v938 = vstv %s937
        %v939 = vmul.f32 %v938, %v255
        %941 = vrot.lane.b32.xlu0 %v939, 108
        %v942 = vpop.permute.xlu0 %941
        %v943 = vrot.slane %v942, 1
        %v944 = vsel %vm913, %v942, %v943
        %v946 = vadd.f32 %v905, %v944
        %s947 = sld [smem:[#allocation2 + $0x54]]
        %v948 = vstv %s947
        %v949 = vmul.f32 %v948, %v298
        %951 = vrot.lane.b32.xlu0 %v949, 108
        %v952 = vpop.permute.xlu0 %951
        %v953 = vrot.slane %v952, 1
        %v954 = vsel %vm913, %v952, %v953
        %v956 = vadd.f32 %v916, %v954
        %s957 = sld [smem:[#allocation2 + $0x55]]
        %v958 = vstv %s957
        %v959 = vmul.f32 %v958, %v298
        %961 = vrot.lane.b32.xlu0 %v959, 108
        %v962 = vpop.permute.xlu0 %961
        %v963 = vrot.slane %v962, 1
        %v964 = vsel %vm913, %v962, %v963
        %v966 = vadd.f32 %v926, %v964
        %s967 = sld [smem:[#allocation2 + $0x56]]
        %v968 = vstv %s967
        %v969 = vmul.f32 %v968, %v298
        %971 = vrot.lane.b32.xlu0 %v969, 108
        %v972 = vpop.permute.xlu0 %971
        %v973 = vrot.slane %v972, 1
        %v974 = vsel %vm913, %v972, %v973
        %v976 = vadd.f32 %v936, %v974
        %s977 = sld [smem:[#allocation2 + $0x57]]
        %v978 = vstv %s977
        %v979 = vmul.f32 %v978, %v298
        %981 = vrot.lane.b32.xlu0 %v979, 108
        %v982 = vpop.permute.xlu0 %981
        %v983 = vrot.slane %v982, 1
        %v984 = vsel %vm913, %v982, %v983
        %v986 = vadd.f32 %v946, %v984
        %s987 = sld [smem:[#allocation2 + $0x58]]
        %v988 = vstv %s987
        %v989 = vmul.f32 %v988, %v340
        %991 = vrot.lane.b32.xlu0 %v989, 108
        %v992 = vpop.permute.xlu0 %991
        %v993 = vrot.slane %v992, 1
        %v994 = vsel %vm913, %v992, %v993
        %v996 = vadd.f32 %v956, %v994
        %s997 = sld [smem:[#allocation2 + $0x59]]
        %v998 = vstv %s997
        %v999 = vmul.f32 %v998, %v340
        %1001 = vrot.lane.b32.xlu0 %v999, 108
        %v1002 = vpop.permute.xlu0 %1001
        %v1003 = vrot.slane %v1002, 1
        %v1004 = vsel %vm913, %v1002, %v1003
        %v1006 = vadd.f32 %v966, %v1004
        %s1007 = sld [smem:[#allocation2 + $0x5a]]
        %v1008 = vstv %s1007
        %v1009 = vmul.f32 %v1008, %v340
        %1011 = vrot.lane.b32.xlu0 %v1009, 108
        %v1012 = vpop.permute.xlu0 %1011
        %v1013 = vrot.slane %v1012, 1
        %v1014 = vsel %vm913, %v1012, %v1013
        %v1016 = vadd.f32 %v976, %v1014
        %s1017 = sld [smem:[#allocation2 + $0x5b]]
        %v1018 = vstv %s1017
        %v1019 = vmul.f32 %v1018, %v340
        %1021 = vrot.lane.b32.xlu0 %v1019, 108
        %v1022 = vpop.permute.xlu0 %1021
        %v1023 = vrot.slane %v1022, 1
        %v1024 = vsel %vm913, %v1022, %v1023
        %v1026 = vadd.f32 %v986, %v1024
        %s1027 = sld [smem:[#allocation2 + $0x5c]]
        %v1028 = vstv %s1027
        %v1029 = vmul.f32 %v1028, %v382
        %1031 = vrot.lane.b32.xlu0 %v1029, 108
        %v1032 = vpop.permute.xlu0 %1031
        %v1033 = vrot.slane %v1032, 1
        %v1034 = vsel %vm913, %v1032, %v1033
        %v1036 = vadd.f32 %v996, %v1034
        %s1037 = sld [smem:[#allocation2 + $0x5d]]
        %v1038 = vstv %s1037
        %v1039 = vmul.f32 %v1038, %v382
        %1041 = vrot.lane.b32.xlu0 %v1039, 108
        %v1042 = vpop.permute.xlu0 %1041
        %v1043 = vrot.slane %v1042, 1
        %v1044 = vsel %vm913, %v1042, %v1043
        %v1046 = vadd.f32 %v1006, %v1044
        %s1047 = sld [smem:[#allocation2 + $0x5e]]
        %v1048 = vstv %s1047
        %v1049 = vmul.f32 %v1048, %v382
        %1051 = vrot.lane.b32.xlu0 %v1049, 108
        %v1052 = vpop.permute.xlu0 %1051
        %v1053 = vrot.slane %v1052, 1
        %v1054 = vsel %vm913, %v1052, %v1053
        %v1056 = vadd.f32 %v1016, %v1054
        %s1057 = sld [smem:[#allocation2 + $0x5f]]
        %v1058 = vstv %s1057
        %v1059 = vmul.f32 %v1058, %v382
        %1061 = vrot.lane.b32.xlu0 %v1059, 108
        %v1062 = vpop.permute.xlu0 %1061
        %v1063 = vrot.slane %v1062, 1
        %v1064 = vsel %vm913, %v1062, %v1063
        %v1066 = vadd.f32 %v1026, %v1064
        %s1067 = sld [smem:[#allocation2 + $0x60]]
        %v1068 = vstv %s1067
        %v1069 = vmul.f32 %v1068, %v255
        %1071 = vrot.lane.b32.xlu0 %v1069, 92
        %v1072 = vpop.permute.xlu0 %1071
        %v1073 = vrot.slane %v1072, 1
        %vm1074 = vcmask 752640
        %v1075 = vsel %vm1074, %v1072, %v1073
        %v1077 = vadd.f32 %v1036, %v1075
        %s1078 = sld [smem:[#allocation2 + $0x61]]
        %v1079 = vstv %s1078
        %v1080 = vmul.f32 %v1079, %v255
        %1082 = vrot.lane.b32.xlu0 %v1080, 92
        %v1083 = vpop.permute.xlu0 %1082
        %v1084 = vrot.slane %v1083, 1
        %v1085 = vsel %vm1074, %v1083, %v1084
        %v1087 = vadd.f32 %v1046, %v1085
        %s1088 = sld [smem:[#allocation2 + $0x62]]
        %v1089 = vstv %s1088
        %v1090 = vmul.f32 %v1089, %v255
        %1092 = vrot.lane.b32.xlu0 %v1090, 92
        %v1093 = vpop.permute.xlu0 %1092
        %v1094 = vrot.slane %v1093, 1
        %v1095 = vsel %vm1074, %v1093, %v1094
        %v1097 = vadd.f32 %v1056, %v1095
        %s1098 = sld [smem:[#allocation2 + $0x63]]
        %v1099 = vstv %s1098
        %v1100 = vmul.f32 %v1099, %v255
        %1102 = vrot.lane.b32.xlu0 %v1100, 92
        %v1103 = vpop.permute.xlu0 %1102
        %v1104 = vrot.slane %v1103, 1
        %v1105 = vsel %vm1074, %v1103, %v1104
        %v1107 = vadd.f32 %v1066, %v1105
        %s1108 = sld [smem:[#allocation2 + $0x64]]
        %v1109 = vstv %s1108
        %v1110 = vmul.f32 %v1109, %v298
        %1112 = vrot.lane.b32.xlu0 %v1110, 92
        %v1113 = vpop.permute.xlu0 %1112
        %v1114 = vrot.slane %v1113, 1
        %v1115 = vsel %vm1074, %v1113, %v1114
        %v1117 = vadd.f32 %v1077, %v1115
        %s1118 = sld [smem:[#allocation2 + $0x65]]
        %v1119 = vstv %s1118
        %v1120 = vmul.f32 %v1119, %v298
        %1122 = vrot.lane.b32.xlu0 %v1120, 92
        %v1123 = vpop.permute.xlu0 %1122
        %v1124 = vrot.slane %v1123, 1
        %v1125 = vsel %vm1074, %v1123, %v1124
        %v1127 = vadd.f32 %v1087, %v1125
        %s1128 = sld [smem:[#allocation2 + $0x66]]
        %v1129 = vstv %s1128
        %v1130 = vmul.f32 %v1129, %v298
        %1132 = vrot.lane.b32.xlu0 %v1130, 92
        %v1133 = vpop.permute.xlu0 %1132
        %v1134 = vrot.slane %v1133, 1
        %v1135 = vsel %vm1074, %v1133, %v1134
        %v1137 = vadd.f32 %v1097, %v1135
        %s1138 = sld [smem:[#allocation2 + $0x67]]
        %v1139 = vstv %s1138
        %v1140 = vmul.f32 %v1139, %v298
        %1142 = vrot.lane.b32.xlu0 %v1140, 92
        %v1143 = vpop.permute.xlu0 %1142
        %v1144 = vrot.slane %v1143, 1
        %v1145 = vsel %vm1074, %v1143, %v1144
        %v1147 = vadd.f32 %v1107, %v1145
        %s1148 = sld [smem:[#allocation2 + $0x68]]
        %v1149 = vstv %s1148
        %v1150 = vmul.f32 %v1149, %v340
        %1152 = vrot.lane.b32.xlu0 %v1150, 92
        %v1153 = vpop.permute.xlu0 %1152
        %v1154 = vrot.slane %v1153, 1
        %v1155 = vsel %vm1074, %v1153, %v1154
        %v1157 = vadd.f32 %v1117, %v1155
        %s1158 = sld [smem:[#allocation2 + $0x69]]
        %v1159 = vstv %s1158
        %v1160 = vmul.f32 %v1159, %v340
        %1162 = vrot.lane.b32.xlu0 %v1160, 92
        %v1163 = vpop.permute.xlu0 %1162
        %v1164 = vrot.slane %v1163, 1
        %v1165 = vsel %vm1074, %v1163, %v1164
        %v1167 = vadd.f32 %v1127, %v1165
        %s1168 = sld [smem:[#allocation2 + $0x6a]]
        %v1169 = vstv %s1168
        %v1170 = vmul.f32 %v1169, %v340
        %1172 = vrot.lane.b32.xlu0 %v1170, 92
        %v1173 = vpop.permute.xlu0 %1172
        %v1174 = vrot.slane %v1173, 1
        %v1175 = vsel %vm1074, %v1173, %v1174
        %v1177 = vadd.f32 %v1137, %v1175
        %s1178 = sld [smem:[#allocation2 + $0x6b]]
        %v1179 = vstv %s1178
        %v1180 = vmul.f32 %v1179, %v340
        %1182 = vrot.lane.b32.xlu0 %v1180, 92
        %v1183 = vpop.permute.xlu0 %1182
        %v1184 = vrot.slane %v1183, 1
        %v1185 = vsel %vm1074, %v1183, %v1184
        %v1187 = vadd.f32 %v1147, %v1185
        %s1188 = sld [smem:[#allocation2 + $0x6c]]
        %v1189 = vstv %s1188
        %v1190 = vmul.f32 %v1189, %v382
        %1192 = vrot.lane.b32.xlu0 %v1190, 92
        %v1193 = vpop.permute.xlu0 %1192
        %v1194 = vrot.slane %v1193, 1
        %v1195 = vsel %vm1074, %v1193, %v1194
        %v1197 = vadd.f32 %v1157, %v1195
        %s1198 = sld [smem:[#allocation2 + $0x6d]]
        %v1199 = vstv %s1198
        %v1200 = vmul.f32 %v1199, %v382
        %1202 = vrot.lane.b32.xlu0 %v1200, 92
        %v1203 = vpop.permute.xlu0 %1202
        %v1204 = vrot.slane %v1203, 1
        %v1205 = vsel %vm1074, %v1203, %v1204
        %v1207 = vadd.f32 %v1167, %v1205
        %s1208 = sld [smem:[#allocation2 + $0x6e]]
        %v1209 = vstv %s1208
        %v1210 = vmul.f32 %v1209, %v382
        %1212 = vrot.lane.b32.xlu0 %v1210, 92
        %v1213 = vpop.permute.xlu0 %1212
        %v1214 = vrot.slane %v1213, 1
        %v1215 = vsel %vm1074, %v1213, %v1214
        %v1217 = vadd.f32 %v1177, %v1215
        %s1218 = sld [smem:[#allocation2 + $0x6f]]
        %v1219 = vstv %s1218
        %v1220 = vmul.f32 %v1219, %v382
        %1222 = vrot.lane.b32.xlu0 %v1220, 92
        %v1223 = vpop.permute.xlu0 %1222
        %v1224 = vrot.slane %v1223, 1
        %v1225 = vsel %vm1074, %v1223, %v1224
        %v1227 = vadd.f32 %v1187, %v1225
        %s1228 = sld [smem:[#allocation2 + $0x70]]
        %v1229 = vstv %s1228
        %v1230 = vmul.f32 %v1229, %v255
        %1232 = vrot.lane.b32.xlu0 %v1230, 91
        %v1233 = vpop.permute.xlu0 %1232
        %v1234 = vrot.slane %v1233, 1
        %vm1235 = vcmask 744448
        %v1236 = vsel %vm1235, %v1233, %v1234
        %v1238 = vadd.f32 %v1197, %v1236
        %s1239 = sld [smem:[#allocation2 + $0x71]]
        %v1240 = vstv %s1239
        %v1241 = vmul.f32 %v1240, %v255
        %1243 = vrot.lane.b32.xlu0 %v1241, 91
        %v1244 = vpop.permute.xlu0 %1243
        %v1245 = vrot.slane %v1244, 1
        %v1246 = vsel %vm1235, %v1244, %v1245
        %v1248 = vadd.f32 %v1207, %v1246
        %s1249 = sld [smem:[#allocation2 + $0x72]]
        %v1250 = vstv %s1249
        %v1251 = vmul.f32 %v1250, %v255
        %1253 = vrot.lane.b32.xlu0 %v1251, 91
        %v1254 = vpop.permute.xlu0 %1253
        %v1255 = vrot.slane %v1254, 1
        %v1256 = vsel %vm1235, %v1254, %v1255
        %v1258 = vadd.f32 %v1217, %v1256
        %s1259 = sld [smem:[#allocation2 + $0x73]]
        %v1260 = vstv %s1259
        %v1261 = vmul.f32 %v1260, %v255
        %1263 = vrot.lane.b32.xlu0 %v1261, 91
        %v1264 = vpop.permute.xlu0 %1263
        %v1265 = vrot.slane %v1264, 1
        %v1266 = vsel %vm1235, %v1264, %v1265
        %v1268 = vadd.f32 %v1227, %v1266
        %s1269 = sld [smem:[#allocation2 + $0x74]]
        %v1270 = vstv %s1269
        %v1271 = vmul.f32 %v1270, %v298
        %1273 = vrot.lane.b32.xlu0 %v1271, 91
        %v1274 = vpop.permute.xlu0 %1273
        %v1275 = vrot.slane %v1274, 1
        %v1276 = vsel %vm1235, %v1274, %v1275
        %v1278 = vadd.f32 %v1238, %v1276
        %s1279 = sld [smem:[#allocation2 + $0x75]]
        %v1280 = vstv %s1279
        %v1281 = vmul.f32 %v1280, %v298
        %1283 = vrot.lane.b32.xlu0 %v1281, 91
        %v1284 = vpop.permute.xlu0 %1283
        %v1285 = vrot.slane %v1284, 1
        %v1286 = vsel %vm1235, %v1284, %v1285
        %v1288 = vadd.f32 %v1248, %v1286
        %s1289 = sld [smem:[#allocation2 + $0x76]]
        %v1290 = vstv %s1289
        %v1291 = vmul.f32 %v1290, %v298
        %1293 = vrot.lane.b32.xlu0 %v1291, 91
        %v1294 = vpop.permute.xlu0 %1293
        %v1295 = vrot.slane %v1294, 1
        %v1296 = vsel %vm1235, %v1294, %v1295
        %v1298 = vadd.f32 %v1258, %v1296
        %s1299 = sld [smem:[#allocation2 + $0x77]]
        %v1300 = vstv %s1299
        %v1301 = vmul.f32 %v1300, %v298
        %1303 = vrot.lane.b32.xlu0 %v1301, 91
        %v1304 = vpop.permute.xlu0 %1303
        %v1305 = vrot.slane %v1304, 1
        %v1306 = vsel %vm1235, %v1304, %v1305
        %v1308 = vadd.f32 %v1268, %v1306
        %s1309 = sld [smem:[#allocation2 + $0x78]]
        %v1310 = vstv %s1309
        %v1311 = vmul.f32 %v1310, %v340
        %1313 = vrot.lane.b32.xlu0 %v1311, 91
        %v1314 = vpop.permute.xlu0 %1313
        %v1315 = vrot.slane %v1314, 1
        %v1316 = vsel %vm1235, %v1314, %v1315
        %v1318 = vadd.f32 %v1278, %v1316
        %s1319 = sld [smem:[#allocation2 + $0x79]]
        %v1320 = vstv %s1319
        %v1321 = vmul.f32 %v1320, %v340
        %1323 = vrot.lane.b32.xlu0 %v1321, 91
        %v1324 = vpop.permute.xlu0 %1323
        %v1325 = vrot.slane %v1324, 1
        %v1326 = vsel %vm1235, %v1324, %v1325
        %v1328 = vadd.f32 %v1288, %v1326
        %s1329 = sld [smem:[#allocation2 + $0x7a]]
        %v1330 = vstv %s1329
        %v1331 = vmul.f32 %v1330, %v340
        %1333 = vrot.lane.b32.xlu0 %v1331, 91
        %v1334 = vpop.permute.xlu0 %1333
        %v1335 = vrot.slane %v1334, 1
        %v1336 = vsel %vm1235, %v1334, %v1335
        %v1338 = vadd.f32 %v1298, %v1336
        %s1339 = sld [smem:[#allocation2 + $0x7b]]
        %v1340 = vstv %s1339
        %v1341 = vmul.f32 %v1340, %v340
        %1343 = vrot.lane.b32.xlu0 %v1341, 91
        %v1344 = vpop.permute.xlu0 %1343
        %v1345 = vrot.slane %v1344, 1
        %v1346 = vsel %vm1235, %v1344, %v1345
        %v1348 = vadd.f32 %v1308, %v1346
        %s1349 = sld [smem:[#allocation2 + $0x7c]]
        %v1350 = vstv %s1349
        %v1351 = vmul.f32 %v1350, %v382
        %1353 = vrot.lane.b32.xlu0 %v1351, 91
        %v1354 = vpop.permute.xlu0 %1353
        %v1355 = vrot.slane %v1354, 1
        %v1356 = vsel %vm1235, %v1354, %v1355
        %v1358 = vadd.f32 %v1318, %v1356
        %s1359 = sld [smem:[#allocation2 + $0x7d]]
        %v1360 = vstv %s1359
        %v1361 = vmul.f32 %v1360, %v382
        %1363 = vrot.lane.b32.xlu0 %v1361, 91
        %v1364 = vpop.permute.xlu0 %1363
        %v1365 = vrot.slane %v1364, 1
        %v1366 = vsel %vm1235, %v1364, %v1365
        %v1368 = vadd.f32 %v1328, %v1366
        %s1369 = sld [smem:[#allocation2 + $0x7e]]
        %v1370 = vstv %s1369
        %v1371 = vmul.f32 %v1370, %v382
        %1373 = vrot.lane.b32.xlu0 %v1371, 91
        %v1374 = vpop.permute.xlu0 %1373
        %v1375 = vrot.slane %v1374, 1
        %v1376 = vsel %vm1235, %v1374, %v1375
        %v1378 = vadd.f32 %v1338, %v1376
        %s1379 = sld [smem:[#allocation2 + $0x7f]]
        %v1380 = vstv %s1379
        %v1381 = vmul.f32 %v1380, %v382
        %1383 = vrot.lane.b32.xlu0 %v1381, 91
        %v1384 = vpop.permute.xlu0 %1383
        %v1385 = vrot.slane %v1384, 1
        %v1386 = vsel %vm1235, %v1384, %v1385
        %v1388 = vadd.f32 %v1348, %v1386
        %s1389 = sld [smem:[#allocation2 + $0x80]]
        %v1390 = vstv %s1389
        %v1391 = vmul.f32 %v1390, %v255
        %1393 = vrot.lane.b32.xlu0 %v1391, 90
        %v1394 = vpop.permute.xlu0 %1393
        %v1395 = vrot.slane %v1394, 1
        %vm1396 = vcmask 736256
        %v1397 = vsel %vm1396, %v1394, %v1395
        %v1399 = vadd.f32 %v1358, %v1397
        %s1400 = sld [smem:[#allocation2 + $0x81]]
        %v1401 = vstv %s1400
        %v1402 = vmul.f32 %v1401, %v255
        %1404 = vrot.lane.b32.xlu0 %v1402, 90
        %v1405 = vpop.permute.xlu0 %1404
        %v1406 = vrot.slane %v1405, 1
        %v1407 = vsel %vm1396, %v1405, %v1406
        %v1409 = vadd.f32 %v1368, %v1407
        %s1410 = sld [smem:[#allocation2 + $0x82]]
        %v1411 = vstv %s1410
        %v1412 = vmul.f32 %v1411, %v255
        %1414 = vrot.lane.b32.xlu0 %v1412, 90
        %v1415 = vpop.permute.xlu0 %1414
        %v1416 = vrot.slane %v1415, 1
        %v1417 = vsel %vm1396, %v1415, %v1416
        %v1419 = vadd.f32 %v1378, %v1417
        %s1420 = sld [smem:[#allocation2 + $0x83]]
        %v1421 = vstv %s1420
        %v1422 = vmul.f32 %v1421, %v255
        %1424 = vrot.lane.b32.xlu0 %v1422, 90
        %v1425 = vpop.permute.xlu0 %1424
        %v1426 = vrot.slane %v1425, 1
        %v1427 = vsel %vm1396, %v1425, %v1426
        %v1429 = vadd.f32 %v1388, %v1427
        %s1430 = sld [smem:[#allocation2 + $0x84]]
        %v1431 = vstv %s1430
        %v1432 = vmul.f32 %v1431, %v298
        %1434 = vrot.lane.b32.xlu0 %v1432, 90
        %v1435 = vpop.permute.xlu0 %1434
        %v1436 = vrot.slane %v1435, 1
        %v1437 = vsel %vm1396, %v1435, %v1436
        %v1439 = vadd.f32 %v1399, %v1437
        %s1440 = sld [smem:[#allocation2 + $0x85]]
        %v1441 = vstv %s1440
        %v1442 = vmul.f32 %v1441, %v298
        %1444 = vrot.lane.b32.xlu0 %v1442, 90
        %v1445 = vpop.permute.xlu0 %1444
        %v1446 = vrot.slane %v1445, 1
        %v1447 = vsel %vm1396, %v1445, %v1446
        %v1449 = vadd.f32 %v1409, %v1447
        %s1450 = sld [smem:[#allocation2 + $0x86]]
        %v1451 = vstv %s1450
        %v1452 = vmul.f32 %v1451, %v298
        %1454 = vrot.lane.b32.xlu0 %v1452, 90
        %v1455 = vpop.permute.xlu0 %1454
        %v1456 = vrot.slane %v1455, 1
        %v1457 = vsel %vm1396, %v1455, %v1456
        %v1459 = vadd.f32 %v1419, %v1457
        %s1460 = sld [smem:[#allocation2 + $0x87]]
        %v1461 = vstv %s1460
        %v1462 = vmul.f32 %v1461, %v298
        %1464 = vrot.lane.b32.xlu0 %v1462, 90
        %v1465 = vpop.permute.xlu0 %1464
        %v1466 = vrot.slane %v1465, 1
        %v1467 = vsel %vm1396, %v1465, %v1466
        %v1469 = vadd.f32 %v1429, %v1467
        %s1470 = sld [smem:[#allocation2 + $0x88]]
        %v1471 = vstv %s1470
        %v1472 = vmul.f32 %v1471, %v340
        %1474 = vrot.lane.b32.xlu0 %v1472, 90
        %v1475 = vpop.permute.xlu0 %1474
        %v1476 = vrot.slane %v1475, 1
        %v1477 = vsel %vm1396, %v1475, %v1476
        %v1479 = vadd.f32 %v1439, %v1477
        %s1480 = sld [smem:[#allocation2 + $0x89]]
        %v1481 = vstv %s1480
        %v1482 = vmul.f32 %v1481, %v340
        %1484 = vrot.lane.b32.xlu0 %v1482, 90
        %v1485 = vpop.permute.xlu0 %1484
        %v1486 = vrot.slane %v1485, 1
        %v1487 = vsel %vm1396, %v1485, %v1486
        %v1489 = vadd.f32 %v1449, %v1487
        %s1490 = sld [smem:[#allocation2 + $0x8a]]
        %v1491 = vstv %s1490
        %v1492 = vmul.f32 %v1491, %v340
        %1494 = vrot.lane.b32.xlu0 %v1492, 90
        %v1495 = vpop.permute.xlu0 %1494
        %v1496 = vrot.slane %v1495, 1
        %v1497 = vsel %vm1396, %v1495, %v1496
        %v1499 = vadd.f32 %v1459, %v1497
        %s1500 = sld [smem:[#allocation2 + $0x8b]]
        %v1501 = vstv %s1500
        %v1502 = vmul.f32 %v1501, %v340
        %1504 = vrot.lane.b32.xlu0 %v1502, 90
        %v1505 = vpop.permute.xlu0 %1504
        %v1506 = vrot.slane %v1505, 1
        %v1507 = vsel %vm1396, %v1505, %v1506
        %v1509 = vadd.f32 %v1469, %v1507
        %s1510 = sld [smem:[#allocation2 + $0x8c]]
        %v1511 = vstv %s1510
        %v1512 = vmul.f32 %v1511, %v382
        %1514 = vrot.lane.b32.xlu0 %v1512, 90
        %v1515 = vpop.permute.xlu0 %1514
        %v1516 = vrot.slane %v1515, 1
        %v1517 = vsel %vm1396, %v1515, %v1516
        %v1519 = vadd.f32 %v1479, %v1517
        %s1520 = sld [smem:[#allocation2 + $0x8d]]
        %v1521 = vstv %s1520
        %v1522 = vmul.f32 %v1521, %v382
        %1524 = vrot.lane.b32.xlu0 %v1522, 90
        %v1525 = vpop.permute.xlu0 %1524
        %v1526 = vrot.slane %v1525, 1
        %v1527 = vsel %vm1396, %v1525, %v1526
        %v1529 = vadd.f32 %v1489, %v1527
        %s1530 = sld [smem:[#allocation2 + $0x8e]]
        %v1531 = vstv %s1530
        %v1532 = vmul.f32 %v1531, %v382
        %1534 = vrot.lane.b32.xlu0 %v1532, 90
        %v1535 = vpop.permute.xlu0 %1534
        %v1536 = vrot.slane %v1535, 1
        %v1537 = vsel %vm1396, %v1535, %v1536
        %v1539 = vadd.f32 %v1499, %v1537
        %s1540 = sld [smem:[#allocation2 + $0x8f]]
        %v1541 = vstv %s1540
        %v1542 = vmul.f32 %v1541, %v382
        %1544 = vrot.lane.b32.xlu0 %v1542, 90
        %v1545 = vpop.permute.xlu0 %1544
        %v1546 = vrot.slane %v1545, 1
        %v1547 = vsel %vm1396, %v1545, %v1546
        %v1549 = vadd.f32 %v1509, %v1547
        %v1551 = vperm.slane %v1519, 0
        %v1552 = vperm.slane %v1519, 1
        %v1553 = vperm.slane %v1519, 2
        %v1558 = vperm.slane %v1529, 0
        %v1559 = vperm.slane %v1529, 1
        %v1560 = vperm.slane %v1529, 2
        %v1565 = vperm.slane %v1539, 0
        %v1566 = vperm.slane %v1539, 1
        %v1567 = vperm.slane %v1539, 2
        %v1572 = vperm.slane %v1549, 0
        %v1573 = vperm.slane %v1549, 1
        %v1574 = vperm.slane %v1549, 2
        %vm1578 = vcmask 1040384
        %v1579 = vsel %vm1578, %v1551, %v1558
        %v1580 = vsel %vm1578, %v1552, %v1559
        %v1581 = vsel %vm1578, %v1553, %v1560
        %vm1582 = vcmask 1041408
        %v1583 = vsel %vm1582, %v1579, %v1565
        %v1584 = vsel %vm1582, %v1580, %v1566
        %v1585 = vsel %vm1582, %v1581, %v1567
        %vm1586 = vcmask 1042432
        %v1587 = vsel %vm1586, %v1583, %v1572
        %v1588 = vsel %vm1586, %v1584, %v1573
        %v1589 = vsel %vm1586, %v1585, %v1574
        %v1592 = vrot.slane %v1588, 4
        %vm1593 = vcmask 1043456
        %v1594 = vsel %vm1593, %v1587, %v1592
        %1596 = vst [vmem:[%s175] sm:$0xff] %v1594
        %1597 = vst [vmem:[%s175 + $0x8] sm:$0xf] %v1589
        %s1598 = sand.u32 %s75, 1
        %s1599 = scalar_lea.sflag [#allocation4], %s1598
        %s1600 = sand.u32 %s75, 1
        %s1601 = smul.addr %s1600, 12
        %s1602 = scalar_lea.vmem [#allocation7], %s1601
        // Predicated region
        $region37: #{tpu_custom_call.1} parent=27 // pred_check
          %p1603 = pneg %p85
        $region38: #{tpu_custom_call.1} parent=27 // pred_check_branch
          %1605 = sbr.rel (%p1603) target = $region40
        $region39: #{tpu_custom_call.1} parent=27 // pred_region
          %1607 = vsyncadd %s1599, 0
          %s1608 = smul.addr %s20, 3
          %s1609 = smul.addr %s1608, 4
          %s1610 = scalar_lea.hbm %s2, %s1609
          %s1612 = sshll.u32 %s1602, 4
          %s1613 = int_to_ptr.vmem [resolvable:$true] %s1612
          %s1614 = sshll.u32 %s1610, 4
          %s1615 = int_to_ptr.hbm [resolvable:$true] %s1614
          %1617 = dma.vmem_to_hbm [thread:$0]  %s1613, 192, %s1615, %s1599
        $region40: #{tpu_custom_call.1} parent=27 // pred_fallthru
          _
      $region28: #{tpu_custom_call.1} parent=5 // pred_fallthru
        _
      %p1618 = scmp.le.s32.totalorder 2, %s15
      // Predicated region
      $region41: #{tpu_custom_call.1} parent=5 // pred_check
        %p1619 = pneg %p1618
      $region42: #{tpu_custom_call.1} parent=5 // pred_check_branch
        %1621 = sbr.rel (%p1619) target = $region44
      $region43: #{tpu_custom_call.1} parent=5 // pred_region
        %s1622 = ssub.s32 %s15, 2
        // Predicated region
        $region45: #{tpu_custom_call.1} parent=43 // pred_check
          %p1623 = pneg %p91
        $region46: #{tpu_custom_call.1} parent=43 // pred_check_branch
          %1625 = sbr.rel (%p1623) target = $region48
        $region47: #{tpu_custom_call.1} parent=43 // pred_region
          %s1626 = sand.u32 %s76, 1
          %s1627 = scalar_lea.sflag [#allocation4], %s1626
          %s1628 = sand.u32 %s76, 1
          %s1629 = smul.addr %s1628, 12
          %s1630 = scalar_lea.vmem [#allocation7], %s1629
          %1632 = dma.done %s1627, 192
        $region48: #{tpu_custom_call.1} parent=43 // pred_fallthru
          _
      $region44: #{tpu_custom_call.1} parent=5 // pred_fallthru
        _
    $region6: #{tpu_custom_call.1} parent=1 // loop_footer
      %s19 = sadd.s32 1, %s15
    $region7: #{tpu_custom_call.1} parent=1 // loop_footer_branch
      %14 = sbr.rel target = $region3
    $region8: #{tpu_custom_call.1} parent=1 // loop_exit
      _
    %1633 = vsyncpa [#allocation3], 1
    %s1634 = scalar_lea.sflag [#allocation3], 1
    %1635 = vsyncpa %s1634, 1
    %1636 = vsyncpa [#allocation4], 1
    %s1637 = scalar_lea.sflag [#allocation4], 1
    %1638 = vsyncpa %s1637, 1
    %1639 = vsyncpa [#allocation5], 1
    %s1640 = scalar_lea.sflag [#allocation5], 1
    %1641 = vsyncpa %s1640, 1

</llo_original>
